<compile_context>
chip_gen: v5e
topology: v5e:2x2
jax: 0.10.0
libtpu: 0.0.40
codegen_flags: <defaults>
</compile_context>

<pallas_src>
import math
import functools

import jax
import jax.numpy as jnp
from jax.experimental import pallas as pl
from jax.experimental.pallas import tpu as pltpu


# ---------------------------------------------------------------------------
# Helpers
# ---------------------------------------------------------------------------
def _triple(v):
    return tuple(v) if isinstance(v, (tuple, list)) else (v, v, v)


def _round_up(x, m):
    return ((x + m - 1) // m) * m


def _pick_k_tile(n, cap=512, align=128):
    """K-dim tile: minimize zero padding, tie-break towards the larger tile."""
    n_al = _round_up(max(n, 1), align)
    best = None
    for t in range(align, cap + 1, align):
        padded = _round_up(n_al, t)
        key = (padded, -t)
        if best is None or key < best[0]:
            best = (key, t, padded)
    return best[1], best[2]


def _pick_n_tile(n, cap=512, align=128):
    """N-dim (Cout) tile: minimize #blocks first (each extra block re-reads the whole
    im2col lhs), then minimize padding, then prefer the larger tile."""
    n_al = _round_up(max(n, 1), align)
    best = None
    for t in range(align, cap + 1, align):
        nb = -(-n_al // t)
        key = (nb, nb * t, -t)
        if best is None or key < best[0]:
            best = (key, t, nb * t)
    return best[1], best[2]


def _pick_tm(m, cap=1024):
    """Largest power-of-two M tile <= cap that still leaves >= 2 blocks (megacore)."""
    t = 8
    while t * 2 <= cap and t * 2 <= max(m // 2, 8):
        t *= 2
    return t


# ---------------------------------------------------------------------------
# Pallas kernel: tiled matmul, K-reduction accumulated in the resident out block,
# fused per-output-channel affine (+ ReLU) on the final K step.
# ---------------------------------------------------------------------------
def _conv_matmul_kernel(lhs_ref, rhs_ref, scale_ref, shift_ref, out_ref, *,
                        apply_relu, rhs_resident, tk):
    k = pl.program_id(2)

    @pl.when(k == 0)
    def _init():
        out_ref[...] = jnp.zeros_like(out_ref)

    if rhs_resident:
        # Whole (Kp, Np) weight lives in VMEM; slice the K rows for this step.
        k0 = pl.multiple_of(k * tk, tk)
        w = rhs_ref[pl.ds(k0, tk), :]
    else:
        w = rhs_ref[...]

    out_ref[...] += jnp.dot(lhs_ref[...], w, preferred_element_type=jnp.float32)

    @pl.when(k == pl.num_programs(2) - 1)
    def _finalize():
        acc = out_ref[...] * scale_ref[...] + shift_ref[...]
        if apply_relu:
            acc = jnp.maximum(acc, 0.0)
        out_ref[...] = acc.astype(out_ref.dtype)


def fused_conv_matmul(lhs_p, rhs_p, scale_p, shift_p, *, apply_relu, tm, tn, tk):
    """out = relu?((lhs @ rhs) * scale + shift), f32 output.

    lhs_p (Mp, Kp) bf16, rhs_p (Kp, Np) bf16, scale_p/shift_p (1, Np) f32.
    Mp % tm == 0, Kp % tk == 0, Np % tn == 0 (no ragged blocks, unmasked stores).
    """
    Mp, Kp = lhs_p.shape
    Kp2, Np = rhs_p.shape
    assert Kp == Kp2 and Mp % tm == 0 and Kp % tk == 0 and Np % tn == 0
    nb_m, nb_n, nb_k = Mp // tm, Np // tn, Kp // tk

    # Keep the whole reordered weight resident in VMEM when it is small and the
    # output channels fit a single N block (the common conv case).
    rhs_resident = (nb_n == 1) and (Kp * Np * rhs_p.dtype.itemsize <= 8 * 1024 * 1024)
    if rhs_resident:
        rhs_spec = pl.BlockSpec((Kp, Np), lambda i, j, k: (0, 0))   # DMA'd once
    else:
        rhs_spec = pl.BlockSpec((tk, tn), lambda i, j, k: (k, j))   # streamed tiles

    kernel = functools.partial(_conv_matmul_kernel, apply_relu=apply_relu,
                               rhs_resident=rhs_resident, tk=tk)

    lhs_sweeps = nb_n
    rhs_sweeps = 1 if rhs_resident else nb_m
    cost = pl.CostEstimate(
        flops=2 * Mp * Kp * Np,
        transcendentals=0,
        bytes_accessed=int(Mp * Kp * lhs_p.dtype.itemsize * lhs_sweeps
                           + Kp * Np * rhs_p.dtype.itemsize * rhs_sweeps
                           + Mp * Np * 4 + 2 * Np * 4),
    )

    return pl.pallas_call(
        kernel,
        out_shape=jax.ShapeDtypeStruct((Mp, Np), jnp.float32),
        grid_spec=pltpu.PrefetchScalarGridSpec(
            num_scalar_prefetch=0,
            grid=(nb_m, nb_n, nb_k),
            in_specs=[
                pl.BlockSpec((tm, tk), lambda i, j, k: (i, k)),   # im2col patches tile
                rhs_spec,                                          # weights
                pl.BlockSpec((1, tn), lambda i, j, k: (0, j)),     # scale
                pl.BlockSpec((1, tn), lambda i, j, k: (0, j)),     # shift
            ],
            # out block resident across the K axis -> accumulate into it directly.
            out_specs=pl.BlockSpec((tm, tn), lambda i, j, k: (i, j)),
        ),
        compiler_params=pltpu.CompilerParams(
            dimension_semantics=("parallel", "parallel", "arbitrary"),
            vmem_limit_bytes=64 * 1024 * 1024,
        ),
        cost_estimate=cost,
    )(lhs_p, rhs_p, scale_p, shift_p)


# ---------------------------------------------------------------------------
# Glue: channels-last im2col with K padding folded into the tap concat
# ---------------------------------------------------------------------------
def _im2col_3d_cl(x, ksize, stride, padding, dilation, Kp, compute_dtype=jnp.bfloat16):
    """x: (N, C, D, H, W). Returns lhs (N*Do*Ho*Wo, Kp) bf16 with K ordered
    (kd, kh, kw, Cin) (zero-padded to Kp), plus (Do, Ho, Wo)."""
    N, C, D, H, W = x.shape
    kd, kh, kw = ksize
    sd, sh, sw = stride
    pd, ph, pw = padding
    dd, dh, dw = dilation
    Do = (D + 2 * pd - dd * (kd - 1) - 1) // sd + 1
    Ho = (H + 2 * ph - dh * (kh - 1) - 1) // sh + 1
    Wo = (W + 2 * pw - dw * (kw - 1) - 1) // sw + 1
    # One input-sized transpose to channels-last + one bf16 cast (halves HBM bytes).
    # TODO(synk): downstream layers could keep activations channels-last and skip this pass.
    x_cl = jnp.transpose(x, (0, 2, 3, 4, 1)).astype(compute_dtype)
    xp = jnp.pad(x_cl, ((0, 0), (pd, pd), (ph, ph), (pw, pw), (0, 0)))
    taps = []
    for id_ in range(kd):
        for ih in range(kh):
            for iw in range(kw):
                taps.append(xp[:,
                               id_ * dd: id_ * dd + (Do - 1) * sd + 1: sd,
                               ih * dh: ih * dh + (Ho - 1) * sh + 1: sh,
                               iw * dw: iw * dw + (Wo - 1) * sw + 1: sw,
                               :])                    # (N, Do, Ho, Wo, C)
    K0 = kd * kh * kw * C
    if Kp > K0:
        # Fold the K zero-padding into the concat (no extra full-tensor pad pass).
        taps.append(jnp.zeros((N, Do, Ho, Wo, Kp - K0), compute_dtype))
    lhs = jnp.concatenate(taps, axis=-1).reshape(N * Do * Ho * Wo, Kp)
    # TODO(synk): implicit GEMM (in-kernel DMA of tap slabs from an HBM-resident input)
    # would cut HBM reads by up to kvol; the materialized im2col is kept in XLA here.
    return lhs, (Do, Ho, Wo)


@functools.partial(jax.jit, static_argnames=(
    "ksize", "stride", "padding", "dilation", "apply_relu", "out_planes", "Kp", "tn", "tk"))
def _conv3d_forward(x, rhs_p, scale_p, shift_p, *, ksize, stride, padding, dilation,
                    apply_relu, out_planes, Kp, tn, tk):
    N = x.shape[0]
    lhs, (Do, Ho, Wo) = _im2col_3d_cl(x, ksize, stride, padding, dilation, Kp)
    M = lhs.shape[0]
    tm = _pick_tm(M)
    Mp = _round_up(M, tm)
    if Mp > M:
        lhs = jnp.pad(lhs, ((0, Mp - M), (0, 0)))     # unmasked stores, no ragged blocks
    out = fused_conv_matmul(lhs, rhs_p, scale_p, shift_p,
                            apply_relu=apply_relu, tm=tm, tn=tn, tk=tk)
    out = out[:M, :out_planes].reshape(N, Do, Ho, Wo, out_planes)
    # TODO(synk): the module spec requires NCDHW, so one output-sized transpose remains.
    return jnp.transpose(out, (0, 4, 1, 2, 3))


# ---------------------------------------------------------------------------
# Module equivalent of torch_utils.Conv3d
# ---------------------------------------------------------------------------
class Conv3dPallas:
    def __init__(self, in_planes, out_planes, kernel_size=1, stride=1, padding=0,
                 dilation=1, bias=False, norm=None, activation=None, *, key):
        self.ksize = _triple(kernel_size)
        self.stride = _triple(stride)
        self.padding = _triple(padding)
        self.dilation = _triple(dilation)
        self.out_planes = out_planes
        kvol = self.ksize[0] * self.ksize[1] * self.ksize[2]
        fan_in = in_planes * kvol
        bound = 1.0 / math.sqrt(fan_in)                  # PyTorch default conv init range
        wkey, bkey = jax.random.split(key)
        self.weight = jax.random.uniform(
            wkey, (out_planes, in_planes) + self.ksize, minval=-bound, maxval=bound,
            dtype=jnp.float32)
        self.bias = (jax.random.uniform(bkey, (out_planes,), minval=-bound, maxval=bound,
                                        dtype=jnp.float32) if bias else None)
        # nn.BatchNorm3d default params / running stats (eval-mode folding).
        self.use_bn = norm is not None
        self.bn_gamma = jnp.ones((out_planes,), jnp.float32)
        self.bn_beta = jnp.zeros((out_planes,), jnp.float32)
        self.bn_mean = jnp.zeros((out_planes,), jnp.float32)
        self.bn_var = jnp.ones((out_planes,), jnp.float32)
        self.bn_eps = 1e-5
        self.apply_relu = activation is not None
        # TODO(synk): training-mode BatchNorm3d (batch statistics + running-stat update)
        # is not implemented; only eval-mode running-stats folding is done here.

        # ---- Precompute matmul-side constants ONCE (not per call) ----
        self.K0 = in_planes * kvol
        self.tk, self.Kp = _pick_k_tile(self.K0)         # padding-minimizing K tile
        self.tn, self.Np = _pick_n_tile(out_planes)      # single-N-sweep when Cout pads <= 512
        # weight OIDHW -> (kd,kh,kw,Cin,Cout) -> (K0, Cout), bf16, padded to (Kp, Np).
        w_perm = jnp.transpose(self.weight, (2, 3, 4, 1, 0)).reshape(self.K0, out_planes)
        self.rhs_p = jnp.pad(w_perm.astype(jnp.bfloat16),
                             ((0, self.Kp - self.K0), (0, self.Np - out_planes)))
        # Fold bias + eval-mode BN into a per-output-channel affine (applied in f32).
        scale = jnp.ones((out_planes,), jnp.float32)
        shift = jnp.zeros((out_planes,), jnp.float32)
        if self.bias is not None:
            shift = shift + self.bias
        if self.use_bn:
            inv_std = self.bn_gamma / jnp.sqrt(self.bn_var + self.bn_eps)
            shift = (shift - self.bn_mean) * inv_std + self.bn_beta
            scale = scale * inv_std
        self.scale_p = jnp.pad(scale, (0, self.Np - out_planes)).reshape(1, self.Np)
        self.shift_p = jnp.pad(shift, (0, self.Np - out_planes)).reshape(1, self.Np)

    def __call__(self, x):
        return _conv3d_forward(
            x, self.rhs_p, self.scale_p, self.shift_p,
            ksize=self.ksize, stride=self.stride, padding=self.padding,
            dilation=self.dilation, apply_relu=self.apply_relu,
            out_planes=self.out_planes, Kp=self.Kp, tn=self.tn, tk=self.tk)


# ---------------------------------------------------------------------------
# Reference (plain JAX) for verification
# ---------------------------------------------------------------------------
def conv3d_ref(x, w, stride, padding, dilation, bias=None):
    dn = jax.lax.conv_dimension_numbers(x.shape, w.shape, ('NCDHW', 'OIDHW', 'NCDHW'))
    out = jax.lax.conv_general_dilated(
        x, w, window_strides=stride, padding=[(p, p) for p in padding],
        rhs_dilation=dilation, dimension_numbers=dn)
    if bias is not None:
        out = out + bias[None, :, None, None, None]
    return out


def _bf16_round(a):
    # Reference operands rounded through bf16 so the comparison isolates kernel errors.
    return a.astype(jnp.bfloat16).astype(jnp.float32)


if __name__ == "__main__":
    key = jax.random.PRNGKey(0)
    kx, k1, k2 = jax.random.split(key, 3)

    # Small NCDHW input: batch=2, channels=4, D=H=W=8
    x = jax.random.normal(kx, (2, 4, 8, 8, 8), dtype=jnp.float32)

    # Case 1: module defaults (1x1x1 conv, no bias, no norm, no activation)
    m1 = Conv3dPallas(4, 8, key=k1)
    y1 = jax.block_until_ready(m1(x))
    r1 = conv3d_ref(_bf16_round(x), _bf16_round(m1.weight),
                    m1.stride, m1.padding, m1.dilation)
    assert jnp.allclose(y1, r1, atol=5e-3, rtol=5e-3), "case1 mismatch"

    # Case 2: 3x3x3 conv, padding=1, bias, BN (eval-folded), ReLU
    m2 = Conv3dPallas(4, 8, kernel_size=3, stride=1, padding=1, dilation=1,
                      bias=True, norm="BN", activation="relu", key=k2)
    y2 = jax.block_until_ready(m2(x))
    inv_std = m2.bn_gamma / jnp.sqrt(m2.bn_var + m2.bn_eps)
    r2 = conv3d_ref(_bf16_round(x), _bf16_round(m2.weight),
                    m2.stride, m2.padding, m2.dilation, bias=m2.bias)
    r2 = (r2 - m2.bn_mean[None, :, None, None, None]) * inv_std[None, :, None, None, None] \
         + m2.bn_beta[None, :, None, None, None]
    r2 = jnp.maximum(r2, 0.0)
    assert jnp.allclose(y2, r2, atol=5e-3, rtol=5e-3), "case2 mismatch"

    print("KERNEL_OK")
</pallas_src>

<mosaic_0001>
module attributes {stable_mosaic.version = 11 : i64} {
  func.func @_conv_matmul_kernel(%arg0: i32, %arg1: i32, %arg2: i32, %arg3: memref<512x128xbf16, #tpu.memory_space<vmem>>, %arg4: memref<128x128xbf16, #tpu.memory_space<vmem>>, %arg5: memref<1x128xf32, #tpu.memory_space<vmem>>, %arg6: memref<1x128xf32, #tpu.memory_space<vmem>>, %arg7: memref<512x128xf32, #tpu.memory_space<vmem>>) attributes {dimension_semantics = [#tpu.dimension_semantics<parallel>, #tpu.dimension_semantics<parallel>, #tpu.dimension_semantics<arbitrary>], iteration_bounds = array<i64: 2, 1, 1>, scalar_prefetch = 0 : i64, scratch_operands = 0 : i64, tpu.core_type = #tpu.core_type<tc>, window_params = [{transform_indices = @transform_0, window_bounds = array<i64: 512, 128>}, {pipeline_mode = #tpu.pipeline_mode<synchronous>, transform_indices = @transform_1, window_bounds = array<i64: 128, 128>}, {transform_indices = @transform_2, window_bounds = array<i64: 1, 128>}, {transform_indices = @transform_3, window_bounds = array<i64: 1, 128>}, {transform_indices = @transform_4, window_bounds = array<i64: 512, 128>}]} {
    %c0_i32 = arith.constant 0 : i32
    %0 = arith.cmpi eq, %arg2, %c0_i32 : i32
    %1 = arith.extui %0 : i1 to i32
    %c0_i32_0 = arith.constant 0 : i32
    %2 = arith.cmpi ne, %1, %c0_i32_0 : i32
    scf.if %2 {
      %cst_9 = arith.constant 0.000000e+00 : f32
      %15 = vector.broadcast %cst_9 : f32 to vector<512x128xf32>
      %c0_10 = arith.constant 0 : index
      %c0_11 = arith.constant 0 : index
      %16 = vector.load %arg7[%c0_10, %c0_11] : memref<512x128xf32, #tpu.memory_space<vmem>>, vector<512x128xf32>
      tpu.vector_store %arg7[%c0_10, %c0_11], %15 {strides = array<i32>} : memref<512x128xf32, #tpu.memory_space<vmem>>, vector<512x128xf32>,
    } else {
    }
    %c128_i32 = arith.constant 128 : i32
    %3 = arith.muli %arg2, %c128_i32 : i32
    %4 = tpu.assume_multiple %3, 128 : i32
    %5 = arith.index_cast %4 : i32 to index
    %c0 = arith.constant 0 : index
    %6 = vector.load %arg4[%5, %c0] : memref<128x128xbf16, #tpu.memory_space<vmem>>, vector<128x128xbf16>
    %c0_1 = arith.constant 0 : index
    %c0_2 = arith.constant 0 : index
    %7 = vector.load %arg7[%c0_1, %c0_2] : memref<512x128xf32, #tpu.memory_space<vmem>>, vector<512x128xf32>
    %c0_3 = arith.constant 0 : index
    %c0_4 = arith.constant 0 : index
    %8 = vector.load %arg3[%c0_3, %c0_4] : memref<512x128xbf16, #tpu.memory_space<vmem>>, vector<512x128xbf16>
    %cst = arith.constant dense<0.000000e+00> : vector<512x128xf32>
    %9 = tpu.matmul %8, %6, %cst {dimension_numbers = #tpu.dot_dimension_numbers<[1], [0], [0], [1], [0, 0, 1, 1], [], []>} : vector<512x128xbf16>, vector<128x128xbf16>, vector<512x128xf32> -> vector<512x128xf32>
    %10 = arith.addf %7, %9 : vector<512x128xf32>
    %c0_5 = arith.constant 0 : index
    %c0_6 = arith.constant 0 : index
    %11 = vector.load %arg7[%c0_5, %c0_6] : memref<512x128xf32, #tpu.memory_space<vmem>>, vector<512x128xf32>
    tpu.vector_store %arg7[%c0_5, %c0_6], %10 {strides = array<i32>} : memref<512x128xf32, #tpu.memory_space<vmem>>, vector<512x128xf32>,
    %c0_i32_7 = arith.constant 0 : i32
    %12 = arith.cmpi eq, %arg2, %c0_i32_7 : i32
    %13 = arith.extui %12 : i1 to i32
    %c0_i32_8 = arith.constant 0 : i32
    %14 = arith.cmpi ne, %13, %c0_i32_8 : i32
    scf.if %14 {
      %c0_9 = arith.constant 0 : index
      %c0_10 = arith.constant 0 : index
      %15 = vector.load %arg7[%c0_9, %c0_10] : memref<512x128xf32, #tpu.memory_space<vmem>>, vector<512x128xf32>
      %c0_11 = arith.constant 0 : index
      %c0_12 = arith.constant 0 : index
      %16 = vector.load %arg5[%c0_11, %c0_12] : memref<1x128xf32, #tpu.memory_space<vmem>>, vector<1x128xf32>
      %17 = vector.broadcast %16 : vector<1x128xf32> to vector<512x128xf32>
      %18 = arith.mulf %15, %17 : vector<512x128xf32>
      %c0_13 = arith.constant 0 : index
      %c0_14 = arith.constant 0 : index
      %19 = vector.load %arg6[%c0_13, %c0_14] : memref<1x128xf32, #tpu.memory_space<vmem>>, vector<1x128xf32>
      %20 = vector.broadcast %19 : vector<1x128xf32> to vector<512x128xf32>
      %21 = arith.addf %18, %20 : vector<512x128xf32>
      %c0_15 = arith.constant 0 : index
      %c0_16 = arith.constant 0 : index
      %22 = vector.load %arg7[%c0_15, %c0_16] : memref<512x128xf32, #tpu.memory_space<vmem>>, vector<512x128xf32>
      tpu.vector_store %arg7[%c0_15, %c0_16], %21 {strides = array<i32>} : memref<512x128xf32, #tpu.memory_space<vmem>>, vector<512x128xf32>,
    } else {
    }
    return
  }
  func.func @transform_0(%arg0: i32, %arg1: i32, %arg2: i32) -> (i32, i32) {
    %c0_i32 = arith.constant 0 : i32
    return %arg0, %arg2 : i32, i32
  }
  func.func @transform_1(%arg0: i32, %arg1: i32, %arg2: i32) -> (i32, i32) {
    %c0_i32 = arith.constant 0 : i32
    %c0_i32_0 = arith.constant 0 : i32
    %c0_i32_1 = arith.constant 0 : i32
    return %c0_i32, %c0_i32_0 : i32, i32
  }
  func.func @transform_2(%arg0: i32, %arg1: i32, %arg2: i32) -> (i32, i32) {
    %c0_i32 = arith.constant 0 : i32
    %c0_i32_0 = arith.constant 0 : i32
    return %c0_i32, %arg1 : i32, i32
  }
  func.func @transform_3(%arg0: i32, %arg1: i32, %arg2: i32) -> (i32, i32) {
    %c0_i32 = arith.constant 0 : i32
    %c0_i32_0 = arith.constant 0 : i32
    return %c0_i32, %arg1 : i32, i32
  }
  func.func @transform_4(%arg0: i32, %arg1: i32, %arg2: i32) -> (i32, i32) {
    %c0_i32 = arith.constant 0 : i32
    return %arg0, %arg1 : i32, i32
  }
}

</mosaic_0001>

<llo_original>
// kernel: _conv3d_forward.1
$region0: #{_conv3d_forward.1}
  #allocation0 [shape = 'u32[]', space=smem, size = 0x4, offset = 0x4, fixed_abs, tag = 'smem constant byte address 0x4 - core index']
  #allocation1 [shape = 'u32[72,128]{1,0:T(1,128)}', space=vmem, size = 0x9000, scoped, tag = 'internal scratch']
  %s0 = inlined_call_operand.vmem [shape: bf16[1024,128], index: 0, kind: input, shape index: {}]
  %s1 = inlined_call_operand.vmem [shape: bf16[128,128], index: 1, kind: input, shape index: {}]
  %s2 = inlined_call_operand.vmem [shape: f32[1,128], index: 2, kind: input, shape index: {}]
  %s3 = inlined_call_operand.vmem [shape: f32[1,128], index: 3, kind: input, shape index: {}]
  %s4 = inlined_call_operand.vmem [shape: f32[1024,128], index: 4, kind: output, shape index: {}]
  %s5 = sld [smem:[#allocation0]]
  $region57: #{_conv3d_forward.1} parent=0
    _
  %s7 = ssub.s32 1, %s5
  %s8 = scalar_select 0, %s7, %s5
  loop: start=0, step=1, limit=4
  $region2: #{_conv3d_forward.1} parent=0 // loop_pre_header
    _
  $region3: #{_conv3d_forward.1} parent=0 // loop_header
    %s10 = sphi 0, %s14
    %p11 = scmp.ge.s32.totalorder %s10, 4
    %s17 = sphi 0, %s36
    %s18 = sphi 0, %s32
    %s19 = sphi 0, %s28
    %s20 = sphi 0, %s17
    %s21 = sphi 0, %s18
    %s22 = sphi 0, %s19
    %s23 = sphi 0, %s20
    %s24 = sphi 0, %s21
    %s25 = sphi 0, %s22
    %s41 = sphi 0, %s43
    %s44 = sphi 0, %s41
    %s45 = sphi 0, %s44
    %s61 = sphi 0, %s45
    %s65 = sphi 0, %s65
    %s67 = sphi 0, %s65
    %s68 = sphi 0, %s67
    %s82 = sphi 0, %s68
    %s88 = sphi 0, %s90
    %s91 = sphi 0, %s88
    %s92 = sphi 0, %s91
    %s108 = sphi 0, %s92
    %s114 = sphi 0, %s116
    %s117 = sphi 0, %s114
    %s118 = sphi 0, %s117
    %s134 = sphi 0, %s118
    %s142 = sphi 0, %s144
    %s145 = sphi 0, %s142
    %s146 = sphi 0, %s145
    %s162 = sphi 0, %s146
  $region4: #{_conv3d_forward.1} parent=0 // loop_header_branch
    %13 = sbr.rel (%p11) target = $region8
  $region5: #{_conv3d_forward.1} parent=0 // loop_body
    %s15 = ssub.s32 %s10, 1
    %s16 = ssub.s32 %s10, 2
    %s26 = sadd.s32 1, %s19
    %p27 = scmp.ge.s32.totalorder %s26, 1
    %s28 = scalar_select %p27, 0, %s26
    %s29 = sadd.s32 1, %s18
    %s30 = scalar_select %p27, %s29, %s18
    %p31 = scmp.ge.s32.totalorder %s30, 1
    %s32 = scalar_select %p31, 0, %s30
    %s33 = sadd.s32 1, %s17
    %s34 = scalar_select %p31, %s33, %s17
    %p35 = scmp.ge.s32.totalorder %s34, 2
    %s36 = scalar_select %p35, 0, %s34
    %s37 = ssub.s32 %s17, %s36
    %s38 = ssub.s32 %s19, %s28
    %s39 = sor.u32 %s37, %s38
    %p40 = scmp.eq.s32.totalorder %s39, 0
    %s42 = sadd.s32 %s41, 1
    %s43 = scalar_select %p40, %s41, %s42
    %p46 = pneg %p40
    %p47 = scmp.eq.s32.totalorder %s10, 1
    %p48 = por %p46, %p47
    %p49 = scmp.ne.s32.totalorder %s41, %s44
    %p50 = scmp.eq.s32.totalorder %s10, 0
    %p51 = por %p49, %p50
    %p52 = scmp.ne.s32.totalorder %s41, %s44
    %p53 = scmp.eq.s32.totalorder %s15, 1
    %p54 = por %p52, %p53
    %p55 = scmp.ne.s32.totalorder %s44, %s45
    %p56 = scmp.eq.s32.totalorder %s15, 0
    %p57 = por %p55, %p56
    %p58 = scmp.ne.s32.totalorder %s44, %s45
    %p59 = scmp.eq.s32.totalorder %s16, 1
    %p60 = por %p58, %p59
    %p62 = scmp.ne.s32.totalorder %s45, %s61
    %p63 = scmp.eq.s32.totalorder %s16, 0
    %p64 = por %p62, %p63
    %s66 = sadd.s32 %s65, 1
    %p69 = scmp.eq.s32.totalorder %s10, 1
    %p70 = scmp.ne.s32.totalorder %s65, %s67
    %p71 = scmp.eq.s32.totalorder %s10, 0
    %p72 = por %p70, %p71
    %p73 = scmp.ne.s32.totalorder %s65, %s67
    %p74 = scmp.eq.s32.totalorder %s15, 1
    %p75 = por %p73, %p74
    %p76 = scmp.ne.s32.totalorder %s67, %s68
    %p77 = scmp.eq.s32.totalorder %s15, 0
    %p78 = por %p76, %p77
    %p79 = scmp.ne.s32.totalorder %s67, %s68
    %p80 = scmp.eq.s32.totalorder %s16, 1
    %p81 = por %p79, %p80
    %p83 = scmp.ne.s32.totalorder %s68, %s82
    %p84 = scmp.eq.s32.totalorder %s16, 0
    %p85 = por %p83, %p84
    %s86 = ssub.s32 %s18, %s32
    %p87 = scmp.eq.s32.totalorder %s86, 0
    %s89 = sadd.s32 %s88, 1
    %s90 = scalar_select %p87, %s88, %s89
    %p93 = pneg %p87
    %p94 = scmp.eq.s32.totalorder %s10, 1
    %p95 = por %p93, %p94
    %p96 = scmp.ne.s32.totalorder %s88, %s91
    %p97 = scmp.eq.s32.totalorder %s10, 0
    %p98 = por %p96, %p97
    %p99 = scmp.ne.s32.totalorder %s88, %s91
    %p100 = scmp.eq.s32.totalorder %s15, 1
    %p101 = por %p99, %p100
    %p102 = scmp.ne.s32.totalorder %s91, %s92
    %p103 = scmp.eq.s32.totalorder %s15, 0
    %p104 = por %p102, %p103
    %p105 = scmp.ne.s32.totalorder %s91, %s92
    %p106 = scmp.eq.s32.totalorder %s16, 1
    %p107 = por %p105, %p106
    %p109 = scmp.ne.s32.totalorder %s92, %s108
    %p110 = scmp.eq.s32.totalorder %s16, 0
    %p111 = por %p109, %p110
    %s112 = ssub.s32 %s18, %s32
    %p113 = scmp.eq.s32.totalorder %s112, 0
    %s115 = sadd.s32 %s114, 1
    %s116 = scalar_select %p113, %s114, %s115
    %p119 = pneg %p113
    %p120 = scmp.eq.s32.totalorder %s10, 1
    %p121 = por %p119, %p120
    %p122 = scmp.ne.s32.totalorder %s114, %s117
    %p123 = scmp.eq.s32.totalorder %s10, 0
    %p124 = por %p122, %p123
    %p125 = scmp.ne.s32.totalorder %s114, %s117
    %p126 = scmp.eq.s32.totalorder %s15, 1
    %p127 = por %p125, %p126
    %p128 = scmp.ne.s32.totalorder %s117, %s118
    %p129 = scmp.eq.s32.totalorder %s15, 0
    %p130 = por %p128, %p129
    %p131 = scmp.ne.s32.totalorder %s117, %s118
    %p132 = scmp.eq.s32.totalorder %s16, 1
    %p133 = por %p131, %p132
    %p135 = scmp.ne.s32.totalorder %s118, %s134
    %p136 = scmp.eq.s32.totalorder %s16, 0
    %p137 = por %p135, %p136
    %s138 = ssub.s32 %s17, %s36
    %s139 = ssub.s32 %s18, %s32
    %s140 = sor.u32 %s138, %s139
    %p141 = scmp.eq.s32.totalorder %s140, 0
    %s143 = sadd.s32 %s142, 1
    %s144 = scalar_select %p141, %s142, %s143
    %p147 = pneg %p141
    %p148 = scmp.eq.s32.totalorder %s10, 1
    %p149 = por %p147, %p148
    %p150 = scmp.ne.s32.totalorder %s142, %s145
    %p151 = scmp.eq.s32.totalorder %s10, 0
    %p152 = por %p150, %p151
    %p153 = scmp.ne.s32.totalorder %s142, %s145
    %p154 = scmp.eq.s32.totalorder %s15, 1
    %p155 = por %p153, %p154
    %p156 = scmp.ne.s32.totalorder %s145, %s146
    %p157 = scmp.eq.s32.totalorder %s15, 0
    %p158 = por %p156, %p157
    %p159 = scmp.ne.s32.totalorder %s145, %s146
    %p160 = scmp.eq.s32.totalorder %s16, 1
    %p161 = por %p159, %p160
    %p163 = scmp.ne.s32.totalorder %s146, %s162
    %p164 = scmp.eq.s32.totalorder %s16, 0
    %p165 = por %p163, %p164
    %p166 = scmp.le.s32.totalorder 1, %s10
    %p167 = scmp.lt.s32.totalorder %s10, 3
    %p168 = pnand %p166, %p167
    %p169 = pneg %p168
    // Predicated region
    $region9: #{_conv3d_forward.1} parent=5 // pred_check
      _
    $region10: #{_conv3d_forward.1} parent=5 // pred_check_branch
      %171 = sbr.rel (%p168) target = $region12
    $region11: #{_conv3d_forward.1} parent=5 // pred_region
      %s172 = ssub.s32 %s10, 1
      // Predicated region
      $region13: #{_conv3d_forward.1} parent=11 // pred_check
        %p173 = pneg %p78
      $region14: #{_conv3d_forward.1} parent=11 // pred_check_branch
        %175 = sbr.rel (%p173) target = $region16
      $region15: #{_conv3d_forward.1} parent=11 // pred_region
        _
      $region16: #{_conv3d_forward.1} parent=11 // pred_fallthru
        _
      // Predicated region
      $region17: #{_conv3d_forward.1} parent=11 // pred_check
        %p176 = pneg %p104
      $region18: #{_conv3d_forward.1} parent=11 // pred_check_branch
        %178 = sbr.rel (%p176) target = $region20
      $region19: #{_conv3d_forward.1} parent=11 // pred_region
        %p179 = scmp.lt.s32.totalorder %s21, 0
        %s180 = scalar_select %p179, %s21, 0
        %s181 = scalar_lea.vmem %s2, %s180
      $region20: #{_conv3d_forward.1} parent=11 // pred_fallthru
        _
      // Predicated region
      $region21: #{_conv3d_forward.1} parent=11 // pred_check
        %p182 = pneg %p130
      $region22: #{_conv3d_forward.1} parent=11 // pred_check_branch
        %184 = sbr.rel (%p182) target = $region24
      $region23: #{_conv3d_forward.1} parent=11 // pred_region
        %p185 = scmp.lt.s32.totalorder %s21, 0
        %s186 = scalar_select %p185, %s21, 0
        %s187 = scalar_lea.vmem %s3, %s186
      $region24: #{_conv3d_forward.1} parent=11 // pred_fallthru
        _
    $region12: #{_conv3d_forward.1} parent=5 // pred_fallthru
      _
    %p188 = scmp.lt.s32.totalorder %s10, 2
    // Predicated region
    $region25: #{_conv3d_forward.1} parent=5 // pred_check
      %p189 = pneg %p188
    $region26: #{_conv3d_forward.1} parent=5 // pred_check_branch
      %191 = sbr.rel (%p189) target = $region28
    $region27: #{_conv3d_forward.1} parent=5 // pred_region
      // Predicated region
      $region29: #{_conv3d_forward.1} parent=27 // pred_check
        %p192 = pneg %p51
      $region30: #{_conv3d_forward.1} parent=27 // pred_check_branch
        %194 = sbr.rel (%p192) target = $region32
      $region31: #{_conv3d_forward.1} parent=27 // pred_region
        %s195 = smul.u32 64, %s17
        %p196 = scmp.lt.s32.totalorder %s195, 127
        %s197 = scalar_select %p196, %s195, 127
        %p198 = scmp.lt.s32.totalorder %s19, 0
        %s199 = scalar_select %p198, %s19, 0
        %s200 = sadd.s32 %s199, %s197
        %s201 = smul.addr %s200, 4
        %s202 = scalar_lea.vmem %s0, %s201
        %s203 = smul.u32 64, %s17
      $region32: #{_conv3d_forward.1} parent=27 // pred_fallthru
        _
    $region28: #{_conv3d_forward.1} parent=5 // pred_fallthru
      _
    %p204 = scmp.le.s32.totalorder 1, %s10
    %p205 = scmp.lt.s32.totalorder %s10, 3
    %p206 = pnand %p204, %p205
    %p207 = pneg %p206
    // Predicated region
    $region33: #{_conv3d_forward.1} parent=5 // pred_check
      _
    $region34: #{_conv3d_forward.1} parent=5 // pred_check_branch
      %209 = sbr.rel (%p206) target = $region36
    $region35: #{_conv3d_forward.1} parent=5 // pred_region
      %s210 = ssub.s32 %s10, 1
      %s211 = smul.u32 64, %s20
      %p212 = scmp.lt.s32.totalorder %s211, 127
      %s213 = scalar_select %p212, %s211, 127
      %p214 = scmp.lt.s32.totalorder %s22, 0
      %s215 = scalar_select %p214, %s22, 0
      %s216 = sadd.s32 %s215, %s213
      %s217 = smul.addr %s216, 4
      %s218 = scalar_lea.vmem %s0, %s217
      %p219 = pneg %p57
      %p220 = pneg %p54
      %p221 = pneg %p78
      %p222 = pneg %p75
      %p223 = scmp.lt.s32.totalorder %s21, 0
      %s224 = scalar_select %p223, %s21, 0
      %s225 = scalar_lea.vmem %s2, %s224
      %p226 = pneg %p104
      %p227 = pneg %p101
      %p228 = scmp.lt.s32.totalorder %s21, 0
      %s229 = scalar_select %p228, %s21, 0
      %s230 = scalar_lea.vmem %s3, %s229
      %p231 = pneg %p130
      %p232 = pneg %p127
      %p233 = pneg %p158
      %p234 = pneg %p155
      %s235 = smul.u32 64, %s20
      %p236 = scmp.lt.s32.totalorder %s235, 127
      %s237 = scalar_select %p236, %s235, 127
      %p238 = scmp.lt.s32.totalorder %s21, 0
      %s239 = scalar_select %p238, %s21, 0
      %s240 = sadd.s32 %s239, %s237
      %s241 = smul.addr %s240, 8
      %s242 = scalar_lea.vmem %s4, %s241
      %s243 = smul.u32 64, %s20
      %p244 = scmp.lt.s32.totalorder %s243, 127
      %s245 = scalar_select %p244, %s243, 127
      %p246 = scmp.lt.s32.totalorder %s22, 0
      %s247 = scalar_select %p246, %s22, 0
      %s248 = sadd.s32 %s247, %s245
      %s249 = smul.addr %s248, 4
      %s250 = scalar_lea.vmem %s0, %s249
      %s251 = smul.u32 64, %s20
      %p252 = scmp.lt.s32.totalorder %s21, 0
      %s253 = scalar_select %p252, %s21, 0
      %s254 = scalar_lea.vmem %s2, %s253
      %p255 = scmp.lt.s32.totalorder %s21, 0
      %s256 = scalar_select %p255, %s21, 0
      %s257 = scalar_lea.vmem %s3, %s256
      %s258 = smul.u32 64, %s20
      %p259 = scmp.lt.s32.totalorder %s258, 127
      %s260 = scalar_select %p259, %s258, 127
      %p261 = scmp.lt.s32.totalorder %s21, 0
      %s262 = scalar_select %p261, %s21, 0
      %s263 = sadd.s32 %s262, %s260
      %s264 = smul.addr %s263, 8
      %s265 = scalar_lea.vmem %s4, %s264
      %s266 = smul.u32 64, %s20
      %p267 = scmp.eq.s32.totalorder %s22, 0
      // Predicated region
      $region37: #{_conv3d_forward.1} parent=35 // pred_check
        %p268 = pneg %p267
      $region38: #{_conv3d_forward.1} parent=35 // pred_check_branch
        %270 = sbr.rel (%p268) target = $region40
      $region39: #{_conv3d_forward.1} parent=35 // pred_region
        %271 = vst [vmem:[%s265] sm:$0xff] 0.0
        %272 = vst [vmem:[%s265 + $0x8] sm:$0xff] 0.0
        %273 = vst [vmem:[%s265 + $0x10] sm:$0xff] 0.0
        %274 = vst [vmem:[%s265 + $0x18] sm:$0xff] 0.0
        %275 = vst [vmem:[%s265 + $0x20] sm:$0xff] 0.0
        %276 = vst [vmem:[%s265 + $0x28] sm:$0xff] 0.0
        %277 = vst [vmem:[%s265 + $0x30] sm:$0xff] 0.0
        %278 = vst [vmem:[%s265 + $0x38] sm:$0xff] 0.0
        %279 = vst [vmem:[%s265 + $0x40] sm:$0xff] 0.0
        %280 = vst [vmem:[%s265 + $0x48] sm:$0xff] 0.0
        %281 = vst [vmem:[%s265 + $0x50] sm:$0xff] 0.0
        %282 = vst [vmem:[%s265 + $0x58] sm:$0xff] 0.0
        %283 = vst [vmem:[%s265 + $0x60] sm:$0xff] 0.0
        %284 = vst [vmem:[%s265 + $0x68] sm:$0xff] 0.0
        %285 = vst [vmem:[%s265 + $0x70] sm:$0xff] 0.0
        %286 = vst [vmem:[%s265 + $0x78] sm:$0xff] 0.0
        %287 = vst [vmem:[%s265 + $0x80] sm:$0xff] 0.0
        %288 = vst [vmem:[%s265 + $0x88] sm:$0xff] 0.0
        %289 = vst [vmem:[%s265 + $0x90] sm:$0xff] 0.0
        %290 = vst [vmem:[%s265 + $0x98] sm:$0xff] 0.0
        %291 = vst [vmem:[%s265 + $0xa0] sm:$0xff] 0.0
        %292 = vst [vmem:[%s265 + $0xa8] sm:$0xff] 0.0
        %293 = vst [vmem:[%s265 + $0xb0] sm:$0xff] 0.0
        %294 = vst [vmem:[%s265 + $0xb8] sm:$0xff] 0.0
        %295 = vst [vmem:[%s265 + $0xc0] sm:$0xff] 0.0
        %296 = vst [vmem:[%s265 + $0xc8] sm:$0xff] 0.0
        %297 = vst [vmem:[%s265 + $0xd0] sm:$0xff] 0.0
        %298 = vst [vmem:[%s265 + $0xd8] sm:$0xff] 0.0
        %299 = vst [vmem:[%s265 + $0xe0] sm:$0xff] 0.0
        %300 = vst [vmem:[%s265 + $0xe8] sm:$0xff] 0.0
        %301 = vst [vmem:[%s265 + $0xf0] sm:$0xff] 0.0
        %302 = vst [vmem:[%s265 + $0xf8] sm:$0xff] 0.0
        %303 = vst [vmem:[%s265 + $0x100] sm:$0xff] 0.0
        %304 = vst [vmem:[%s265 + $0x108] sm:$0xff] 0.0
        %305 = vst [vmem:[%s265 + $0x110] sm:$0xff] 0.0
        %306 = vst [vmem:[%s265 + $0x118] sm:$0xff] 0.0
        %307 = vst [vmem:[%s265 + $0x120] sm:$0xff] 0.0
        %308 = vst [vmem:[%s265 + $0x128] sm:$0xff] 0.0
        %309 = vst [vmem:[%s265 + $0x130] sm:$0xff] 0.0
        %310 = vst [vmem:[%s265 + $0x138] sm:$0xff] 0.0
        %311 = vst [vmem:[%s265 + $0x140] sm:$0xff] 0.0
        %312 = vst [vmem:[%s265 + $0x148] sm:$0xff] 0.0
        %313 = vst [vmem:[%s265 + $0x150] sm:$0xff] 0.0
        %314 = vst [vmem:[%s265 + $0x158] sm:$0xff] 0.0
        %315 = vst [vmem:[%s265 + $0x160] sm:$0xff] 0.0
        %316 = vst [vmem:[%s265 + $0x168] sm:$0xff] 0.0
        %317 = vst [vmem:[%s265 + $0x170] sm:$0xff] 0.0
        %318 = vst [vmem:[%s265 + $0x178] sm:$0xff] 0.0
        %319 = vst [vmem:[%s265 + $0x180] sm:$0xff] 0.0
        %320 = vst [vmem:[%s265 + $0x188] sm:$0xff] 0.0
        %321 = vst [vmem:[%s265 + $0x190] sm:$0xff] 0.0
        %322 = vst [vmem:[%s265 + $0x198] sm:$0xff] 0.0
        %323 = vst [vmem:[%s265 + $0x1a0] sm:$0xff] 0.0
        %324 = vst [vmem:[%s265 + $0x1a8] sm:$0xff] 0.0
        %325 = vst [vmem:[%s265 + $0x1b0] sm:$0xff] 0.0
        %326 = vst [vmem:[%s265 + $0x1b8] sm:$0xff] 0.0
        %327 = vst [vmem:[%s265 + $0x1c0] sm:$0xff] 0.0
        %328 = vst [vmem:[%s265 + $0x1c8] sm:$0xff] 0.0
        %329 = vst [vmem:[%s265 + $0x1d0] sm:$0xff] 0.0
        %330 = vst [vmem:[%s265 + $0x1d8] sm:$0xff] 0.0
        %331 = vst [vmem:[%s265 + $0x1e0] sm:$0xff] 0.0
        %332 = vst [vmem:[%s265 + $0x1e8] sm:$0xff] 0.0
        %333 = vst [vmem:[%s265 + $0x1f0] sm:$0xff] 0.0
        %334 = vst [vmem:[%s265 + $0x1f8] sm:$0xff] 0.0
      $region40: #{_conv3d_forward.1} parent=35 // pred_fallthru
        _
      %s335 = smul.u32 %s22, 128
      %s336 = sshra.s32 %s335, 3
      %s337 = sand.u32 %s335, 7
      %s338 = smul.addr %s336, 4
      %s339 = scalar_lea.vmem %s1, %s338
      %v340 = vld [vmem:[%s339] sm:$0xf]
      %v341 = vld [vmem:[%s339 + $0x4] sm:$0xf]
      %v342 = vld [vmem:[%s339 + $0x8] sm:$0xf]
      %v343 = vld [vmem:[%s339 + $0xc] sm:$0xf]
      %v344 = vld [vmem:[%s339 + $0x10] sm:$0xf]
      %v345 = vld [vmem:[%s339 + $0x14] sm:$0xf]
      %v346 = vld [vmem:[%s339 + $0x18] sm:$0xf]
      %v347 = vld [vmem:[%s339 + $0x1c] sm:$0xf]
      %v348 = vld [vmem:[%s339 + $0x20] sm:$0xf]
      %v349 = vld [vmem:[%s339 + $0x24] sm:$0xf]
      %v350 = vld [vmem:[%s339 + $0x28] sm:$0xf]
      %v351 = vld [vmem:[%s339 + $0x2c] sm:$0xf]
      %v352 = vld [vmem:[%s339 + $0x30] sm:$0xf]
      %v353 = vld [vmem:[%s339 + $0x34] sm:$0xf]
      %v354 = vld [vmem:[%s339 + $0x38] sm:$0xf]
      %v355 = vld [vmem:[%s339 + $0x3c] sm:$0xf]
      %v356 = vld [vmem:[%s265] sm:$0xff]
      %v357 = vld [vmem:[%s265 + $0x8] sm:$0xff]
      %v358 = vld [vmem:[%s265 + $0x10] sm:$0xff]
      %v359 = vld [vmem:[%s265 + $0x18] sm:$0xff]
      %v360 = vld [vmem:[%s265 + $0x20] sm:$0xff]
      %v361 = vld [vmem:[%s265 + $0x28] sm:$0xff]
      %v362 = vld [vmem:[%s265 + $0x30] sm:$0xff]
      %v363 = vld [vmem:[%s265 + $0x38] sm:$0xff]
      %v364 = vld [vmem:[%s265 + $0x40] sm:$0xff]
      %v365 = vld [vmem:[%s265 + $0x48] sm:$0xff]
      %v366 = vld [vmem:[%s265 + $0x50] sm:$0xff]
      %v367 = vld [vmem:[%s265 + $0x58] sm:$0xff]
      %v368 = vld [vmem:[%s265 + $0x60] sm:$0xff]
      %v369 = vld [vmem:[%s265 + $0x68] sm:$0xff]
      %v370 = vld [vmem:[%s265 + $0x70] sm:$0xff]
      %v371 = vld [vmem:[%s265 + $0x78] sm:$0xff]
      %v372 = vld [vmem:[%s265 + $0x80] sm:$0xff]
      %v373 = vld [vmem:[%s265 + $0x88] sm:$0xff]
      %v374 = vld [vmem:[%s265 + $0x90] sm:$0xff]
      %v375 = vld [vmem:[%s265 + $0x98] sm:$0xff]
      %v376 = vld [vmem:[%s265 + $0xa0] sm:$0xff]
      %v377 = vld [vmem:[%s265 + $0xa8] sm:$0xff]
      %v378 = vld [vmem:[%s265 + $0xb0] sm:$0xff]
      %v379 = vld [vmem:[%s265 + $0xb8] sm:$0xff]
      %v380 = vld [vmem:[%s265 + $0xc0] sm:$0xff]
      %v381 = vld [vmem:[%s265 + $0xc8] sm:$0xff]
      %v382 = vld [vmem:[%s265 + $0xd0] sm:$0xff]
      %v383 = vld [vmem:[%s265 + $0xd8] sm:$0xff]
      %v384 = vld [vmem:[%s265 + $0xe0] sm:$0xff]
      %v385 = vld [vmem:[%s265 + $0xe8] sm:$0xff]
      %v386 = vld [vmem:[%s265 + $0xf0] sm:$0xff]
      %v387 = vld [vmem:[%s265 + $0xf8] sm:$0xff]
      %v388 = vld [vmem:[%s265 + $0x100] sm:$0xff]
      %v389 = vld [vmem:[%s265 + $0x108] sm:$0xff]
      %v390 = vld [vmem:[%s265 + $0x110] sm:$0xff]
      %v391 = vld [vmem:[%s265 + $0x118] sm:$0xff]
      %v392 = vld [vmem:[%s265 + $0x120] sm:$0xff]
      %v393 = vld [vmem:[%s265 + $0x128] sm:$0xff]
      %v394 = vld [vmem:[%s265 + $0x130] sm:$0xff]
      %v395 = vld [vmem:[%s265 + $0x138] sm:$0xff]
      %v396 = vld [vmem:[%s265 + $0x140] sm:$0xff]
      %v397 = vld [vmem:[%s265 + $0x148] sm:$0xff]
      %v398 = vld [vmem:[%s265 + $0x150] sm:$0xff]
      %v399 = vld [vmem:[%s265 + $0x158] sm:$0xff]
      %v400 = vld [vmem:[%s265 + $0x160] sm:$0xff]
      %v401 = vld [vmem:[%s265 + $0x168] sm:$0xff]
      %v402 = vld [vmem:[%s265 + $0x170] sm:$0xff]
      %v403 = vld [vmem:[%s265 + $0x178] sm:$0xff]
      %v404 = vld [vmem:[%s265 + $0x180] sm:$0xff]
      %v405 = vld [vmem:[%s265 + $0x188] sm:$0xff]
      %v406 = vld [vmem:[%s265 + $0x190] sm:$0xff]
      %v407 = vld [vmem:[%s265 + $0x198] sm:$0xff]
      %v408 = vld [vmem:[%s265 + $0x1a0] sm:$0xff]
      %v409 = vld [vmem:[%s265 + $0x1a8] sm:$0xff]
      %v410 = vld [vmem:[%s265 + $0x1b0] sm:$0xff]
      %v411 = vld [vmem:[%s265 + $0x1b8] sm:$0xff]
      %v412 = vld [vmem:[%s265 + $0x1c0] sm:$0xff]
      %v413 = vld [vmem:[%s265 + $0x1c8] sm:$0xff]
      %v414 = vld [vmem:[%s265 + $0x1d0] sm:$0xff]
      %v415 = vld [vmem:[%s265 + $0x1d8] sm:$0xff]
      %v416 = vld [vmem:[%s265 + $0x1e0] sm:$0xff]
      %v417 = vld [vmem:[%s265 + $0x1e8] sm:$0xff]
      %v418 = vld [vmem:[%s265 + $0x1f0] sm:$0xff]
      %v419 = vld [vmem:[%s265 + $0x1f8] sm:$0xff]
      %v420 = vld [vmem:[%s250] sm:$0xf]
      %v421 = vld [vmem:[%s250 + $0x4] sm:$0xf]
      %v422 = vld [vmem:[%s250 + $0x8] sm:$0xf]
      %v423 = vld [vmem:[%s250 + $0xc] sm:$0xf]
      %v424 = vld [vmem:[%s250 + $0x10] sm:$0xf]
      %v425 = vld [vmem:[%s250 + $0x14] sm:$0xf]
      %v426 = vld [vmem:[%s250 + $0x18] sm:$0xf]
      %v427 = vld [vmem:[%s250 + $0x1c] sm:$0xf]
      %v428 = vld [vmem:[%s250 + $0x20] sm:$0xf]
      %v429 = vld [vmem:[%s250 + $0x24] sm:$0xf]
      %v430 = vld [vmem:[%s250 + $0x28] sm:$0xf]
      %v431 = vld [vmem:[%s250 + $0x2c] sm:$0xf]
      %v432 = vld [vmem:[%s250 + $0x30] sm:$0xf]
      %v433 = vld [vmem:[%s250 + $0x34] sm:$0xf]
      %v434 = vld [vmem:[%s250 + $0x38] sm:$0xf]
      %v435 = vld [vmem:[%s250 + $0x3c] sm:$0xf]
      %v436 = vld [vmem:[%s250 + $0x40] sm:$0xf]
      %v437 = vld [vmem:[%s250 + $0x44] sm:$0xf]
      %v438 = vld [vmem:[%s250 + $0x48] sm:$0xf]
      %v439 = vld [vmem:[%s250 + $0x4c] sm:$0xf]
      %v440 = vld [vmem:[%s250 + $0x50] sm:$0xf]
      %v441 = vld [vmem:[%s250 + $0x54] sm:$0xf]
      %v442 = vld [vmem:[%s250 + $0x58] sm:$0xf]
      %v443 = vld [vmem:[%s250 + $0x5c] sm:$0xf]
      %v444 = vld [vmem:[%s250 + $0x60] sm:$0xf]
      %v445 = vld [vmem:[%s250 + $0x64] sm:$0xf]
      %v446 = vld [vmem:[%s250 + $0x68] sm:$0xf]
      %v447 = vld [vmem:[%s250 + $0x6c] sm:$0xf]
      %v448 = vld [vmem:[%s250 + $0x70] sm:$0xf]
      %v449 = vld [vmem:[%s250 + $0x74] sm:$0xf]
      %v450 = vld [vmem:[%s250 + $0x78] sm:$0xf]
      %v451 = vld [vmem:[%s250 + $0x7c] sm:$0xf]
      %v452 = vld [vmem:[%s250 + $0x80] sm:$0xf]
      %v453 = vld [vmem:[%s250 + $0x84] sm:$0xf]
      %v454 = vld [vmem:[%s250 + $0x88] sm:$0xf]
      %v455 = vld [vmem:[%s250 + $0x8c] sm:$0xf]
      %v456 = vld [vmem:[%s250 + $0x90] sm:$0xf]
      %v457 = vld [vmem:[%s250 + $0x94] sm:$0xf]
      %v458 = vld [vmem:[%s250 + $0x98] sm:$0xf]
      %v459 = vld [vmem:[%s250 + $0x9c] sm:$0xf]
      %v460 = vld [vmem:[%s250 + $0xa0] sm:$0xf]
      %v461 = vld [vmem:[%s250 + $0xa4] sm:$0xf]
      %v462 = vld [vmem:[%s250 + $0xa8] sm:$0xf]
      %v463 = vld [vmem:[%s250 + $0xac] sm:$0xf]
      %v464 = vld [vmem:[%s250 + $0xb0] sm:$0xf]
      %v465 = vld [vmem:[%s250 + $0xb4] sm:$0xf]
      %v466 = vld [vmem:[%s250 + $0xb8] sm:$0xf]
      %v467 = vld [vmem:[%s250 + $0xbc] sm:$0xf]
      %v468 = vld [vmem:[%s250 + $0xc0] sm:$0xf]
      %v469 = vld [vmem:[%s250 + $0xc4] sm:$0xf]
      %v470 = vld [vmem:[%s250 + $0xc8] sm:$0xf]
      %v471 = vld [vmem:[%s250 + $0xcc] sm:$0xf]
      %v472 = vld [vmem:[%s250 + $0xd0] sm:$0xf]
      %v473 = vld [vmem:[%s250 + $0xd4] sm:$0xf]
      %v474 = vld [vmem:[%s250 + $0xd8] sm:$0xf]
      %v475 = vld [vmem:[%s250 + $0xdc] sm:$0xf]
      %v476 = vld [vmem:[%s250 + $0xe0] sm:$0xf]
      %v477 = vld [vmem:[%s250 + $0xe4] sm:$0xf]
      %v478 = vld [vmem:[%s250 + $0xe8] sm:$0xf]
      %v479 = vld [vmem:[%s250 + $0xec] sm:$0xf]
      %v480 = vld [vmem:[%s250 + $0xf0] sm:$0xf]
      %v481 = vld [vmem:[%s250 + $0xf4] sm:$0xf]
      %v482 = vld [vmem:[%s250 + $0xf8] sm:$0xf]
      %v483 = vld [vmem:[%s250 + $0xfc] sm:$0xf]
      %v548 = vunpack.c.l.b16 %v420
      %v549 = vunpack.c.l.b16 %v421
      %v550 = vunpack.c.l.b16 %v422
      %v551 = vunpack.c.l.b16 %v423
      %v552 = vunpack.c.l.b16 %v424
      %v553 = vunpack.c.l.b16 %v425
      %v554 = vunpack.c.l.b16 %v426
      %v555 = vunpack.c.l.b16 %v427
      %v556 = vunpack.c.l.b16 %v428
      %v557 = vunpack.c.l.b16 %v429
      %v558 = vunpack.c.l.b16 %v430
      %v559 = vunpack.c.l.b16 %v431
      %v560 = vunpack.c.l.b16 %v432
      %v561 = vunpack.c.l.b16 %v433
      %v562 = vunpack.c.l.b16 %v434
      %v563 = vunpack.c.l.b16 %v435
      %v564 = vunpack.c.l.b16 %v436
      %v565 = vunpack.c.l.b16 %v437
      %v566 = vunpack.c.l.b16 %v438
      %v567 = vunpack.c.l.b16 %v439
      %v568 = vunpack.c.l.b16 %v440
      %v569 = vunpack.c.l.b16 %v441
      %v570 = vunpack.c.l.b16 %v442
      %v571 = vunpack.c.l.b16 %v443
      %v572 = vunpack.c.l.b16 %v444
      %v573 = vunpack.c.l.b16 %v445
      %v574 = vunpack.c.l.b16 %v446
      %v575 = vunpack.c.l.b16 %v447
      %v576 = vunpack.c.l.b16 %v448
      %v577 = vunpack.c.l.b16 %v449
      %v578 = vunpack.c.l.b16 %v450
      %v579 = vunpack.c.l.b16 %v451
      %v580 = vunpack.c.l.b16 %v452
      %v581 = vunpack.c.l.b16 %v453
      %v582 = vunpack.c.l.b16 %v454
      %v583 = vunpack.c.l.b16 %v455
      %v584 = vunpack.c.l.b16 %v456
      %v585 = vunpack.c.l.b16 %v457
      %v586 = vunpack.c.l.b16 %v458
      %v587 = vunpack.c.l.b16 %v459
      %v588 = vunpack.c.l.b16 %v460
      %v589 = vunpack.c.l.b16 %v461
      %v590 = vunpack.c.l.b16 %v462
      %v591 = vunpack.c.l.b16 %v463
      %v592 = vunpack.c.l.b16 %v464
      %v593 = vunpack.c.l.b16 %v465
      %v594 = vunpack.c.l.b16 %v466
      %v595 = vunpack.c.l.b16 %v467
      %v596 = vunpack.c.l.b16 %v468
      %v597 = vunpack.c.l.b16 %v469
      %v598 = vunpack.c.l.b16 %v470
      %v599 = vunpack.c.l.b16 %v471
      %v600 = vunpack.c.l.b16 %v472
      %v601 = vunpack.c.l.b16 %v473
      %v602 = vunpack.c.l.b16 %v474
      %v603 = vunpack.c.l.b16 %v475
      %v604 = vunpack.c.l.b16 %v476
      %v605 = vunpack.c.l.b16 %v477
      %v606 = vunpack.c.l.b16 %v478
      %v607 = vunpack.c.l.b16 %v479
      %v608 = vunpack.c.l.b16 %v480
      %v609 = vunpack.c.l.b16 %v481
      %v610 = vunpack.c.l.b16 %v482
      %v611 = vunpack.c.l.b16 %v483
      %v612 = vpack.c.b16 %v549, %v548
      %v613 = vpack.c.b16 %v551, %v550
      %v614 = vpack.c.b16 %v553, %v552
      %v615 = vpack.c.b16 %v555, %v554
      %v616 = vpack.c.b16 %v557, %v556
      %v617 = vpack.c.b16 %v559, %v558
      %v618 = vpack.c.b16 %v561, %v560
      %v619 = vpack.c.b16 %v563, %v562
      %v620 = vpack.c.b16 %v565, %v564
      %v621 = vpack.c.b16 %v567, %v566
      %v622 = vpack.c.b16 %v569, %v568
      %v623 = vpack.c.b16 %v571, %v570
      %v624 = vpack.c.b16 %v573, %v572
      %v625 = vpack.c.b16 %v575, %v574
      %v626 = vpack.c.b16 %v577, %v576
      %v627 = vpack.c.b16 %v579, %v578
      %v628 = vpack.c.b16 %v581, %v580
      %v629 = vpack.c.b16 %v583, %v582
      %v630 = vpack.c.b16 %v585, %v584
      %v631 = vpack.c.b16 %v587, %v586
      %v632 = vpack.c.b16 %v589, %v588
      %v633 = vpack.c.b16 %v591, %v590
      %v634 = vpack.c.b16 %v593, %v592
      %v635 = vpack.c.b16 %v595, %v594
      %v636 = vpack.c.b16 %v597, %v596
      %v637 = vpack.c.b16 %v599, %v598
      %v638 = vpack.c.b16 %v601, %v600
      %v639 = vpack.c.b16 %v603, %v602
      %v640 = vpack.c.b16 %v605, %v604
      %v641 = vpack.c.b16 %v607, %v606
      %v642 = vpack.c.b16 %v609, %v608
      %v643 = vpack.c.b16 %v611, %v610
      %v692 = vunpack.c.l.b16 %v340
      %v693 = vunpack.c.l.b16 %v341
      %v694 = vunpack.c.l.b16 %v342
      %v695 = vunpack.c.l.b16 %v343
      %v696 = vunpack.c.l.b16 %v344
      %v697 = vunpack.c.l.b16 %v345
      %v698 = vunpack.c.l.b16 %v346
      %v699 = vunpack.c.l.b16 %v347
      %v700 = vunpack.c.l.b16 %v348
      %v701 = vunpack.c.l.b16 %v349
      %v702 = vunpack.c.l.b16 %v350
      %v703 = vunpack.c.l.b16 %v351
      %v704 = vunpack.c.l.b16 %v352
      %v705 = vunpack.c.l.b16 %v353
      %v706 = vunpack.c.l.b16 %v354
      %v707 = vunpack.c.l.b16 %v355
      %v708 = vpack.c.b16 %v693, %v692
      %v709 = vpack.c.b16 %v695, %v694
      %v710 = vpack.c.b16 %v697, %v696
      %v711 = vpack.c.b16 %v699, %v698
      %v712 = vpack.c.b16 %v701, %v700
      %v713 = vpack.c.b16 %v703, %v702
      %v714 = vpack.c.b16 %v705, %v704
      %v715 = vpack.c.b16 %v707, %v706
      %724 = vmatpush.bf16.msra.mxu0 %v715
      %725 = vmatpush.bf16.msra.mxu0 %v714
      %726 = vmatpush.bf16.msra.mxu0 %v713
      %727 = vmatpush.bf16.msra.mxu0 %v712
      %728 = vmatpush.bf16.msra.mxu0 %v711
      %729 = vmatpush.bf16.msra.mxu0 %v710
      %730 = vmatpush.bf16.msra.mxu0 %v709
      %731 = vmatpush.bf16.msra.mxu0 %v708
      %732 = vmatmul.bf16.gmra.mxu0 %v612
      %v733 = vpop.f32.mrf.mxu0
      %v734 = vadd.f32 0.0, %v733
      %v735 = vpop.f32.mrf.mxu0
      %v736 = vadd.f32 0.0, %v735
      %737 = vmatmul.bf16.gmra.mxu0 %v613
      %v738 = vpop.f32.mrf.mxu0
      %v739 = vadd.f32 0.0, %v738
      %v740 = vpop.f32.mrf.mxu0
      %v741 = vadd.f32 0.0, %v740
      %742 = vmatmul.bf16.gmra.mxu0 %v614
      %v743 = vpop.f32.mrf.mxu0
      %v744 = vadd.f32 0.0, %v743
      %v745 = vpop.f32.mrf.mxu0
      %v746 = vadd.f32 0.0, %v745
      %747 = vmatmul.bf16.gmra.mxu0 %v615
      %v748 = vpop.f32.mrf.mxu0
      %v749 = vadd.f32 0.0, %v748
      %v750 = vpop.f32.mrf.mxu0
      %v751 = vadd.f32 0.0, %v750
      %752 = vmatmul.bf16.gmra.mxu0 %v616
      %v753 = vpop.f32.mrf.mxu0
      %v754 = vadd.f32 0.0, %v753
      %v755 = vpop.f32.mrf.mxu0
      %v756 = vadd.f32 0.0, %v755
      %757 = vmatmul.bf16.gmra.mxu0 %v617
      %v758 = vpop.f32.mrf.mxu0
      %v759 = vadd.f32 0.0, %v758
      %v760 = vpop.f32.mrf.mxu0
      %v761 = vadd.f32 0.0, %v760
      %762 = vmatmul.bf16.gmra.mxu0 %v618
      %v763 = vpop.f32.mrf.mxu0
      %v764 = vadd.f32 0.0, %v763
      %v765 = vpop.f32.mrf.mxu0
      %v766 = vadd.f32 0.0, %v765
      %767 = vmatmul.bf16.gmra.mxu0 %v619
      %v768 = vpop.f32.mrf.mxu0
      %v769 = vadd.f32 0.0, %v768
      %v770 = vpop.f32.mrf.mxu0
      %v771 = vadd.f32 0.0, %v770
      %772 = vmatmul.bf16.gmra.mxu0 %v620
      %v773 = vpop.f32.mrf.mxu0
      %v774 = vadd.f32 0.0, %v773
      %v775 = vpop.f32.mrf.mxu0
      %v776 = vadd.f32 0.0, %v775
      %777 = vmatmul.bf16.gmra.mxu0 %v621
      %v778 = vpop.f32.mrf.mxu0
      %v779 = vadd.f32 0.0, %v778
      %v780 = vpop.f32.mrf.mxu0
      %v781 = vadd.f32 0.0, %v780
      %782 = vmatmul.bf16.gmra.mxu0 %v622
      %v783 = vpop.f32.mrf.mxu0
      %v784 = vadd.f32 0.0, %v783
      %v785 = vpop.f32.mrf.mxu0
      %v786 = vadd.f32 0.0, %v785
      %787 = vmatmul.bf16.gmra.mxu0 %v623
      %v788 = vpop.f32.mrf.mxu0
      %v789 = vadd.f32 0.0, %v788
      %v790 = vpop.f32.mrf.mxu0
      %v791 = vadd.f32 0.0, %v790
      %792 = vmatmul.bf16.gmra.mxu0 %v624
      %v793 = vpop.f32.mrf.mxu0
      %v794 = vadd.f32 0.0, %v793
      %v795 = vpop.f32.mrf.mxu0
      %v796 = vadd.f32 0.0, %v795
      %797 = vmatmul.bf16.gmra.mxu0 %v625
      %v798 = vpop.f32.mrf.mxu0
      %v799 = vadd.f32 0.0, %v798
      %v800 = vpop.f32.mrf.mxu0
      %v801 = vadd.f32 0.0, %v800
      %802 = vmatmul.bf16.gmra.mxu0 %v626
      %v803 = vpop.f32.mrf.mxu0
      %v804 = vadd.f32 0.0, %v803
      %v805 = vpop.f32.mrf.mxu0
      %v806 = vadd.f32 0.0, %v805
      %807 = vmatmul.bf16.gmra.mxu0 %v627
      %v808 = vpop.f32.mrf.mxu0
      %v809 = vadd.f32 0.0, %v808
      %v810 = vpop.f32.mrf.mxu0
      %v811 = vadd.f32 0.0, %v810
      %812 = vmatmul.bf16.gmra.mxu0 %v628
      %v813 = vpop.f32.mrf.mxu0
      %v814 = vadd.f32 0.0, %v813
      %v815 = vpop.f32.mrf.mxu0
      %v816 = vadd.f32 0.0, %v815
      %817 = vmatmul.bf16.gmra.mxu0 %v629
      %v818 = vpop.f32.mrf.mxu0
      %v819 = vadd.f32 0.0, %v818
      %v820 = vpop.f32.mrf.mxu0
      %v821 = vadd.f32 0.0, %v820
      %822 = vmatmul.bf16.gmra.mxu0 %v630
      %v823 = vpop.f32.mrf.mxu0
      %v824 = vadd.f32 0.0, %v823
      %v825 = vpop.f32.mrf.mxu0
      %v826 = vadd.f32 0.0, %v825
      %827 = vmatmul.bf16.gmra.mxu0 %v631
      %v828 = vpop.f32.mrf.mxu0
      %v829 = vadd.f32 0.0, %v828
      %v830 = vpop.f32.mrf.mxu0
      %v831 = vadd.f32 0.0, %v830
      %832 = vmatmul.bf16.gmra.mxu0 %v632
      %v833 = vpop.f32.mrf.mxu0
      %v834 = vadd.f32 0.0, %v833
      %v835 = vpop.f32.mrf.mxu0
      %v836 = vadd.f32 0.0, %v835
      %837 = vmatmul.bf16.gmra.mxu0 %v633
      %v838 = vpop.f32.mrf.mxu0
      %v839 = vadd.f32 0.0, %v838
      %v840 = vpop.f32.mrf.mxu0
      %v841 = vadd.f32 0.0, %v840
      %842 = vmatmul.bf16.gmra.mxu0 %v634
      %v843 = vpop.f32.mrf.mxu0
      %v844 = vadd.f32 0.0, %v843
      %v845 = vpop.f32.mrf.mxu0
      %v846 = vadd.f32 0.0, %v845
      %847 = vmatmul.bf16.gmra.mxu0 %v635
      %v848 = vpop.f32.mrf.mxu0
      %v849 = vadd.f32 0.0, %v848
      %v850 = vpop.f32.mrf.mxu0
      %v851 = vadd.f32 0.0, %v850
      %852 = vmatmul.bf16.gmra.mxu0 %v636
      %v853 = vpop.f32.mrf.mxu0
      %v854 = vadd.f32 0.0, %v853
      %v855 = vpop.f32.mrf.mxu0
      %v856 = vadd.f32 0.0, %v855
      %857 = vmatmul.bf16.gmra.mxu0 %v637
      %v858 = vpop.f32.mrf.mxu0
      %v859 = vadd.f32 0.0, %v858
      %v860 = vpop.f32.mrf.mxu0
      %v861 = vadd.f32 0.0, %v860
      %862 = vmatmul.bf16.gmra.mxu0 %v638
      %v863 = vpop.f32.mrf.mxu0
      %v864 = vadd.f32 0.0, %v863
      %v865 = vpop.f32.mrf.mxu0
      %v866 = vadd.f32 0.0, %v865
      %867 = vmatmul.bf16.gmra.mxu0 %v639
      %v868 = vpop.f32.mrf.mxu0
      %v869 = vadd.f32 0.0, %v868
      %v870 = vpop.f32.mrf.mxu0
      %v871 = vadd.f32 0.0, %v870
      %872 = vmatmul.bf16.gmra.mxu0 %v640
      %v873 = vpop.f32.mrf.mxu0
      %v874 = vadd.f32 0.0, %v873
      %v875 = vpop.f32.mrf.mxu0
      %v876 = vadd.f32 0.0, %v875
      %877 = vmatmul.bf16.gmra.mxu0 %v641
      %v878 = vpop.f32.mrf.mxu0
      %v879 = vadd.f32 0.0, %v878
      %v880 = vpop.f32.mrf.mxu0
      %v881 = vadd.f32 0.0, %v880
      %882 = vmatmul.bf16.gmra.mxu0 %v642
      %v883 = vpop.f32.mrf.mxu0
      %v884 = vadd.f32 0.0, %v883
      %v885 = vpop.f32.mrf.mxu0
      %v886 = vadd.f32 0.0, %v885
      %887 = vmatmul.bf16.gmra.mxu0 %v643
      %v888 = vpop.f32.mrf.mxu0
      %v889 = vadd.f32 0.0, %v888
      %v890 = vpop.f32.mrf.mxu0
      %v891 = vadd.f32 0.0, %v890
      %892 = vdwg.mxu0
      %v893 = vadd.f32 %v356, %v734
      %v894 = vadd.f32 %v357, %v736
      %v895 = vadd.f32 %v358, %v739
      %v896 = vadd.f32 %v359, %v741
      %v897 = vadd.f32 %v360, %v744
      %v898 = vadd.f32 %v361, %v746
      %v899 = vadd.f32 %v362, %v749
      %v900 = vadd.f32 %v363, %v751
      %v901 = vadd.f32 %v364, %v754
      %v902 = vadd.f32 %v365, %v756
      %v903 = vadd.f32 %v366, %v759
      %v904 = vadd.f32 %v367, %v761
      %v905 = vadd.f32 %v368, %v764
      %v906 = vadd.f32 %v369, %v766
      %v907 = vadd.f32 %v370, %v769
      %v908 = vadd.f32 %v371, %v771
      %v909 = vadd.f32 %v372, %v774
      %v910 = vadd.f32 %v373, %v776
      %v911 = vadd.f32 %v374, %v779
      %v912 = vadd.f32 %v375, %v781
      %v913 = vadd.f32 %v376, %v784
      %v914 = vadd.f32 %v377, %v786
      %v915 = vadd.f32 %v378, %v789
      %v916 = vadd.f32 %v379, %v791
      %v917 = vadd.f32 %v380, %v794
      %v918 = vadd.f32 %v381, %v796
      %v919 = vadd.f32 %v382, %v799
      %v920 = vadd.f32 %v383, %v801
      %v921 = vadd.f32 %v384, %v804
      %v922 = vadd.f32 %v385, %v806
      %v923 = vadd.f32 %v386, %v809
      %v924 = vadd.f32 %v387, %v811
      %v925 = vadd.f32 %v388, %v814
      %v926 = vadd.f32 %v389, %v816
      %v927 = vadd.f32 %v390, %v819
      %v928 = vadd.f32 %v391, %v821
      %v929 = vadd.f32 %v392, %v824
      %v930 = vadd.f32 %v393, %v826
      %v931 = vadd.f32 %v394, %v829
      %v932 = vadd.f32 %v395, %v831
      %v933 = vadd.f32 %v396, %v834
      %v934 = vadd.f32 %v397, %v836
      %v935 = vadd.f32 %v398, %v839
      %v936 = vadd.f32 %v399, %v841
      %v937 = vadd.f32 %v400, %v844
      %v938 = vadd.f32 %v401, %v846
      %v939 = vadd.f32 %v402, %v849
      %v940 = vadd.f32 %v403, %v851
      %v941 = vadd.f32 %v404, %v854
      %v942 = vadd.f32 %v405, %v856
      %v943 = vadd.f32 %v406, %v859
      %v944 = vadd.f32 %v407, %v861
      %v945 = vadd.f32 %v408, %v864
      %v946 = vadd.f32 %v409, %v866
      %v947 = vadd.f32 %v410, %v869
      %v948 = vadd.f32 %v411, %v871
      %v949 = vadd.f32 %v412, %v874
      %v950 = vadd.f32 %v413, %v876
      %v951 = vadd.f32 %v414, %v879
      %v952 = vadd.f32 %v415, %v881
      %v953 = vadd.f32 %v416, %v884
      %v954 = vadd.f32 %v417, %v886
      %v955 = vadd.f32 %v418, %v889
      %v956 = vadd.f32 %v419, %v891
      %957 = vst [vmem:[%s265] sm:$0xff] %v893
      %958 = vst [vmem:[%s265 + $0x8] sm:$0xff] %v894
      %959 = vst [vmem:[%s265 + $0x10] sm:$0xff] %v895
      %960 = vst [vmem:[%s265 + $0x18] sm:$0xff] %v896
      %961 = vst [vmem:[%s265 + $0x20] sm:$0xff] %v897
      %962 = vst [vmem:[%s265 + $0x28] sm:$0xff] %v898
      %963 = vst [vmem:[%s265 + $0x30] sm:$0xff] %v899
      %964 = vst [vmem:[%s265 + $0x38] sm:$0xff] %v900
      %965 = vst [vmem:[%s265 + $0x40] sm:$0xff] %v901
      %966 = vst [vmem:[%s265 + $0x48] sm:$0xff] %v902
      %967 = vst [vmem:[%s265 + $0x50] sm:$0xff] %v903
      %968 = vst [vmem:[%s265 + $0x58] sm:$0xff] %v904
      %969 = vst [vmem:[%s265 + $0x60] sm:$0xff] %v905
      %970 = vst [vmem:[%s265 + $0x68] sm:$0xff] %v906
      %971 = vst [vmem:[%s265 + $0x70] sm:$0xff] %v907
      %972 = vst [vmem:[%s265 + $0x78] sm:$0xff] %v908
      %973 = vst [vmem:[%s265 + $0x80] sm:$0xff] %v909
      %974 = vst [vmem:[%s265 + $0x88] sm:$0xff] %v910
      %975 = vst [vmem:[%s265 + $0x90] sm:$0xff] %v911
      %976 = vst [vmem:[%s265 + $0x98] sm:$0xff] %v912
      %977 = vst [vmem:[%s265 + $0xa0] sm:$0xff] %v913
      %978 = vst [vmem:[%s265 + $0xa8] sm:$0xff] %v914
      %979 = vst [vmem:[%s265 + $0xb0] sm:$0xff] %v915
      %980 = vst [vmem:[%s265 + $0xb8] sm:$0xff] %v916
      %981 = vst [vmem:[%s265 + $0xc0] sm:$0xff] %v917
      %982 = vst [vmem:[%s265 + $0xc8] sm:$0xff] %v918
      %983 = vst [vmem:[%s265 + $0xd0] sm:$0xff] %v919
      %984 = vst [vmem:[%s265 + $0xd8] sm:$0xff] %v920
      %985 = vst [vmem:[%s265 + $0xe0] sm:$0xff] %v921
      %986 = vst [vmem:[%s265 + $0xe8] sm:$0xff] %v922
      %987 = vst [vmem:[%s265 + $0xf0] sm:$0xff] %v923
      %988 = vst [vmem:[%s265 + $0xf8] sm:$0xff] %v924
      %989 = vst [vmem:[%s265 + $0x100] sm:$0xff] %v925
      %990 = vst [vmem:[%s265 + $0x108] sm:$0xff] %v926
      %991 = vst [vmem:[%s265 + $0x110] sm:$0xff] %v927
      %992 = vst [vmem:[%s265 + $0x118] sm:$0xff] %v928
      %993 = vst [vmem:[%s265 + $0x120] sm:$0xff] %v929
      %994 = vst [vmem:[%s265 + $0x128] sm:$0xff] %v930
      %995 = vst [vmem:[%s265 + $0x130] sm:$0xff] %v931
      %996 = vst [vmem:[%s265 + $0x138] sm:$0xff] %v932
      %997 = vst [vmem:[%s265 + $0x140] sm:$0xff] %v933
      %998 = vst [vmem:[%s265 + $0x148] sm:$0xff] %v934
      %999 = vst [vmem:[%s265 + $0x150] sm:$0xff] %v935
      %1000 = vst [vmem:[%s265 + $0x158] sm:$0xff] %v936
      %1001 = vst [vmem:[%s265 + $0x160] sm:$0xff] %v937
      %1002 = vst [vmem:[%s265 + $0x168] sm:$0xff] %v938
      %1003 = vst [vmem:[%s265 + $0x170] sm:$0xff] %v939
      %1004 = vst [vmem:[%s265 + $0x178] sm:$0xff] %v940
      %1005 = vst [vmem:[%s265 + $0x180] sm:$0xff] %v941
      %1006 = vst [vmem:[%s265 + $0x188] sm:$0xff] %v942
      %1007 = vst [vmem:[%s265 + $0x190] sm:$0xff] %v943
      %1008 = vst [vmem:[%s265 + $0x198] sm:$0xff] %v944
      %1009 = vst [vmem:[%s265 + $0x1a0] sm:$0xff] %v945
      %1010 = vst [vmem:[%s265 + $0x1a8] sm:$0xff] %v946
      %1011 = vst [vmem:[%s265 + $0x1b0] sm:$0xff] %v947
      %1012 = vst [vmem:[%s265 + $0x1b8] sm:$0xff] %v948
      %1013 = vst [vmem:[%s265 + $0x1c0] sm:$0xff] %v949
      %1014 = vst [vmem:[%s265 + $0x1c8] sm:$0xff] %v950
      %1015 = vst [vmem:[%s265 + $0x1d0] sm:$0xff] %v951
      %1016 = vst [vmem:[%s265 + $0x1d8] sm:$0xff] %v952
      %1017 = vst [vmem:[%s265 + $0x1e0] sm:$0xff] %v953
      %1018 = vst [vmem:[%s265 + $0x1e8] sm:$0xff] %v954
      %1019 = vst [vmem:[%s265 + $0x1f0] sm:$0xff] %v955
      %1020 = vst [vmem:[%s265 + $0x1f8] sm:$0xff] %v956
      // Predicated region
      $region41: #{_conv3d_forward.1} parent=35 // pred_check
        %p1021 = pneg %p267
      $region42: #{_conv3d_forward.1} parent=35 // pred_check_branch
        %1023 = sbr.rel (%p1021) target = $region44
      $region43: #{_conv3d_forward.1} parent=35 // pred_region
        %v1024 = vld [vmem:[%s265] sm:$0xff]
        %v1025 = vld [vmem:[%s265 + $0x8] sm:$0xff]
        %v1026 = vld [vmem:[%s265 + $0x10] sm:$0xff]
        %v1027 = vld [vmem:[%s265 + $0x18] sm:$0xff]
        %v1028 = vld [vmem:[%s265 + $0x20] sm:$0xff]
        %v1029 = vld [vmem:[%s265 + $0x28] sm:$0xff]
        %v1030 = vld [vmem:[%s265 + $0x30] sm:$0xff]
        %v1031 = vld [vmem:[%s265 + $0x38] sm:$0xff]
        %v1032 = vld [vmem:[%s265 + $0x40] sm:$0xff]
        %v1033 = vld [vmem:[%s265 + $0x48] sm:$0xff]
        %v1034 = vld [vmem:[%s265 + $0x50] sm:$0xff]
        %v1035 = vld [vmem:[%s265 + $0x58] sm:$0xff]
        %v1036 = vld [vmem:[%s265 + $0x60] sm:$0xff]
        %v1037 = vld [vmem:[%s265 + $0x68] sm:$0xff]
        %v1038 = vld [vmem:[%s265 + $0x70] sm:$0xff]
        %v1039 = vld [vmem:[%s265 + $0x78] sm:$0xff]
        %v1040 = vld [vmem:[%s265 + $0x80] sm:$0xff]
        %v1041 = vld [vmem:[%s265 + $0x88] sm:$0xff]
        %v1042 = vld [vmem:[%s265 + $0x90] sm:$0xff]
        %v1043 = vld [vmem:[%s265 + $0x98] sm:$0xff]
        %v1044 = vld [vmem:[%s265 + $0xa0] sm:$0xff]
        %v1045 = vld [vmem:[%s265 + $0xa8] sm:$0xff]
        %v1046 = vld [vmem:[%s265 + $0xb0] sm:$0xff]
        %v1047 = vld [vmem:[%s265 + $0xb8] sm:$0xff]
        %v1048 = vld [vmem:[%s265 + $0xc0] sm:$0xff]
        %v1049 = vld [vmem:[%s265 + $0xc8] sm:$0xff]
        %v1050 = vld [vmem:[%s265 + $0xd0] sm:$0xff]
        %v1051 = vld [vmem:[%s265 + $0xd8] sm:$0xff]
        %v1052 = vld [vmem:[%s265 + $0xe0] sm:$0xff]
        %v1053 = vld [vmem:[%s265 + $0xe8] sm:$0xff]
        %v1054 = vld [vmem:[%s265 + $0xf0] sm:$0xff]
        %v1055 = vld [vmem:[%s265 + $0xf8] sm:$0xff]
        %v1056 = vld [vmem:[%s265 + $0x100] sm:$0xff]
        %v1057 = vld [vmem:[%s265 + $0x108] sm:$0xff]
        %v1058 = vld [vmem:[%s265 + $0x110] sm:$0xff]
        %v1059 = vld [vmem:[%s265 + $0x118] sm:$0xff]
        %v1060 = vld [vmem:[%s265 + $0x120] sm:$0xff]
        %v1061 = vld [vmem:[%s265 + $0x128] sm:$0xff]
        %v1062 = vld [vmem:[%s265 + $0x130] sm:$0xff]
        %v1063 = vld [vmem:[%s265 + $0x138] sm:$0xff]
        %v1064 = vld [vmem:[%s265 + $0x140] sm:$0xff]
        %v1065 = vld [vmem:[%s265 + $0x148] sm:$0xff]
        %v1066 = vld [vmem:[%s265 + $0x150] sm:$0xff]
        %v1067 = vld [vmem:[%s265 + $0x158] sm:$0xff]
        %v1068 = vld [vmem:[%s265 + $0x160] sm:$0xff]
        %v1069 = vld [vmem:[%s265 + $0x168] sm:$0xff]
        %v1070 = vld [vmem:[%s265 + $0x170] sm:$0xff]
        %v1071 = vld [vmem:[%s265 + $0x178] sm:$0xff]
        %v1072 = vld [vmem:[%s265 + $0x180] sm:$0xff]
        %v1073 = vld [vmem:[%s265 + $0x188] sm:$0xff]
        %v1074 = vld [vmem:[%s265 + $0x190] sm:$0xff]
        %v1075 = vld [vmem:[%s265 + $0x198] sm:$0xff]
        %v1076 = vld [vmem:[%s265 + $0x1a0] sm:$0xff]
        %v1077 = vld [vmem:[%s265 + $0x1a8] sm:$0xff]
        %v1078 = vld [vmem:[%s265 + $0x1b0] sm:$0xff]
        %v1079 = vld [vmem:[%s265 + $0x1b8] sm:$0xff]
        %v1080 = vld [vmem:[%s265 + $0x1c0] sm:$0xff]
        %v1081 = vld [vmem:[%s265 + $0x1c8] sm:$0xff]
        %v1082 = vld [vmem:[%s265 + $0x1d0] sm:$0xff]
        %v1083 = vld [vmem:[%s265 + $0x1d8] sm:$0xff]
        %v1084 = vld [vmem:[%s265 + $0x1e0] sm:$0xff]
        %v1085 = vld [vmem:[%s265 + $0x1e8] sm:$0xff]
        %v1086 = vld [vmem:[%s265 + $0x1f0] sm:$0xff]
        %v1087 = vld [vmem:[%s265 + $0x1f8] sm:$0xff]
        %v1088 = vld [vmem:[%s254] sm:$0x1]
        %v1090 = vperm.slane %v1088, 0
        %v1092 = vmul.f32 %v1024, %v1090
        %v1093 = vmul.f32 %v1025, %v1090
        %v1094 = vmul.f32 %v1026, %v1090
        %v1095 = vmul.f32 %v1027, %v1090
        %v1096 = vmul.f32 %v1028, %v1090
        %v1097 = vmul.f32 %v1029, %v1090
        %v1098 = vmul.f32 %v1030, %v1090
        %v1099 = vmul.f32 %v1031, %v1090
        %v1100 = vmul.f32 %v1032, %v1090
        %v1101 = vmul.f32 %v1033, %v1090
        %v1102 = vmul.f32 %v1034, %v1090
        %v1103 = vmul.f32 %v1035, %v1090
        %v1104 = vmul.f32 %v1036, %v1090
        %v1105 = vmul.f32 %v1037, %v1090
        %v1106 = vmul.f32 %v1038, %v1090
        %v1107 = vmul.f32 %v1039, %v1090
        %v1108 = vmul.f32 %v1040, %v1090
        %v1109 = vmul.f32 %v1041, %v1090
        %v1110 = vmul.f32 %v1042, %v1090
        %v1111 = vmul.f32 %v1043, %v1090
        %v1112 = vmul.f32 %v1044, %v1090
        %v1113 = vmul.f32 %v1045, %v1090
        %v1114 = vmul.f32 %v1046, %v1090
        %v1115 = vmul.f32 %v1047, %v1090
        %v1116 = vmul.f32 %v1048, %v1090
        %v1117 = vmul.f32 %v1049, %v1090
        %v1118 = vmul.f32 %v1050, %v1090
        %v1119 = vmul.f32 %v1051, %v1090
        %v1120 = vmul.f32 %v1052, %v1090
        %v1121 = vmul.f32 %v1053, %v1090
        %v1122 = vmul.f32 %v1054, %v1090
        %v1123 = vmul.f32 %v1055, %v1090
        %v1124 = vmul.f32 %v1056, %v1090
        %v1125 = vmul.f32 %v1057, %v1090
        %v1126 = vmul.f32 %v1058, %v1090
        %v1127 = vmul.f32 %v1059, %v1090
        %v1128 = vmul.f32 %v1060, %v1090
        %v1129 = vmul.f32 %v1061, %v1090
        %v1130 = vmul.f32 %v1062, %v1090
        %v1131 = vmul.f32 %v1063, %v1090
        %v1132 = vmul.f32 %v1064, %v1090
        %v1133 = vmul.f32 %v1065, %v1090
        %v1134 = vmul.f32 %v1066, %v1090
        %v1135 = vmul.f32 %v1067, %v1090
        %v1136 = vmul.f32 %v1068, %v1090
        %v1137 = vmul.f32 %v1069, %v1090
        %v1138 = vmul.f32 %v1070, %v1090
        %v1139 = vmul.f32 %v1071, %v1090
        %v1140 = vmul.f32 %v1072, %v1090
        %v1141 = vmul.f32 %v1073, %v1090
        %v1142 = vmul.f32 %v1074, %v1090
        %v1143 = vmul.f32 %v1075, %v1090
        %v1144 = vmul.f32 %v1076, %v1090
        %v1145 = vmul.f32 %v1077, %v1090
        %v1146 = vmul.f32 %v1078, %v1090
        %v1147 = vmul.f32 %v1079, %v1090
        %v1148 = vmul.f32 %v1080, %v1090
        %v1149 = vmul.f32 %v1081, %v1090
        %v1150 = vmul.f32 %v1082, %v1090
        %v1151 = vmul.f32 %v1083, %v1090
        %v1152 = vmul.f32 %v1084, %v1090
        %v1153 = vmul.f32 %v1085, %v1090
        %v1154 = vmul.f32 %v1086, %v1090
        %v1155 = vmul.f32 %v1087, %v1090
        %v1156 = vld [vmem:[%s257] sm:$0x1]
        %v1158 = vperm.slane %v1156, 0
        %v1160 = vadd.f32 %v1092, %v1158
        %v1161 = vadd.f32 %v1093, %v1158
        %v1162 = vadd.f32 %v1094, %v1158
        %v1163 = vadd.f32 %v1095, %v1158
        %v1164 = vadd.f32 %v1096, %v1158
        %v1165 = vadd.f32 %v1097, %v1158
        %v1166 = vadd.f32 %v1098, %v1158
        %v1167 = vadd.f32 %v1099, %v1158
        %v1168 = vadd.f32 %v1100, %v1158
        %v1169 = vadd.f32 %v1101, %v1158
        %v1170 = vadd.f32 %v1102, %v1158
        %v1171 = vadd.f32 %v1103, %v1158
        %v1172 = vadd.f32 %v1104, %v1158
        %v1173 = vadd.f32 %v1105, %v1158
        %v1174 = vadd.f32 %v1106, %v1158
        %v1175 = vadd.f32 %v1107, %v1158
        %v1176 = vadd.f32 %v1108, %v1158
        %v1177 = vadd.f32 %v1109, %v1158
        %v1178 = vadd.f32 %v1110, %v1158
        %v1179 = vadd.f32 %v1111, %v1158
        %v1180 = vadd.f32 %v1112, %v1158
        %v1181 = vadd.f32 %v1113, %v1158
        %v1182 = vadd.f32 %v1114, %v1158
        %v1183 = vadd.f32 %v1115, %v1158
        %v1184 = vadd.f32 %v1116, %v1158
        %v1185 = vadd.f32 %v1117, %v1158
        %v1186 = vadd.f32 %v1118, %v1158
        %v1187 = vadd.f32 %v1119, %v1158
        %v1188 = vadd.f32 %v1120, %v1158
        %v1189 = vadd.f32 %v1121, %v1158
        %v1190 = vadd.f32 %v1122, %v1158
        %v1191 = vadd.f32 %v1123, %v1158
        %v1192 = vadd.f32 %v1124, %v1158
        %v1193 = vadd.f32 %v1125, %v1158
        %v1194 = vadd.f32 %v1126, %v1158
        %v1195 = vadd.f32 %v1127, %v1158
        %v1196 = vadd.f32 %v1128, %v1158
        %v1197 = vadd.f32 %v1129, %v1158
        %v1198 = vadd.f32 %v1130, %v1158
        %v1199 = vadd.f32 %v1131, %v1158
        %v1200 = vadd.f32 %v1132, %v1158
        %v1201 = vadd.f32 %v1133, %v1158
        %v1202 = vadd.f32 %v1134, %v1158
        %v1203 = vadd.f32 %v1135, %v1158
        %v1204 = vadd.f32 %v1136, %v1158
        %v1205 = vadd.f32 %v1137, %v1158
        %v1206 = vadd.f32 %v1138, %v1158
        %v1207 = vadd.f32 %v1139, %v1158
        %v1208 = vadd.f32 %v1140, %v1158
        %v1209 = vadd.f32 %v1141, %v1158
        %v1210 = vadd.f32 %v1142, %v1158
        %v1211 = vadd.f32 %v1143, %v1158
        %v1212 = vadd.f32 %v1144, %v1158
        %v1213 = vadd.f32 %v1145, %v1158
        %v1214 = vadd.f32 %v1146, %v1158
        %v1215 = vadd.f32 %v1147, %v1158
        %v1216 = vadd.f32 %v1148, %v1158
        %v1217 = vadd.f32 %v1149, %v1158
        %v1218 = vadd.f32 %v1150, %v1158
        %v1219 = vadd.f32 %v1151, %v1158
        %v1220 = vadd.f32 %v1152, %v1158
        %v1221 = vadd.f32 %v1153, %v1158
        %v1222 = vadd.f32 %v1154, %v1158
        %v1223 = vadd.f32 %v1155, %v1158
        %1224 = vst [vmem:[%s265] sm:$0xff] %v1160
        %1225 = vst [vmem:[%s265 + $0x8] sm:$0xff] %v1161
        %1226 = vst [vmem:[%s265 + $0x10] sm:$0xff] %v1162
        %1227 = vst [vmem:[%s265 + $0x18] sm:$0xff] %v1163
        %1228 = vst [vmem:[%s265 + $0x20] sm:$0xff] %v1164
        %1229 = vst [vmem:[%s265 + $0x28] sm:$0xff] %v1165
        %1230 = vst [vmem:[%s265 + $0x30] sm:$0xff] %v1166
        %1231 = vst [vmem:[%s265 + $0x38] sm:$0xff] %v1167
        %1232 = vst [vmem:[%s265 + $0x40] sm:$0xff] %v1168
        %1233 = vst [vmem:[%s265 + $0x48] sm:$0xff] %v1169
        %1234 = vst [vmem:[%s265 + $0x50] sm:$0xff] %v1170
        %1235 = vst [vmem:[%s265 + $0x58] sm:$0xff] %v1171
        %1236 = vst [vmem:[%s265 + $0x60] sm:$0xff] %v1172
        %1237 = vst [vmem:[%s265 + $0x68] sm:$0xff] %v1173
        %1238 = vst [vmem:[%s265 + $0x70] sm:$0xff] %v1174
        %1239 = vst [vmem:[%s265 + $0x78] sm:$0xff] %v1175
        %1240 = vst [vmem:[%s265 + $0x80] sm:$0xff] %v1176
        %1241 = vst [vmem:[%s265 + $0x88] sm:$0xff] %v1177
        %1242 = vst [vmem:[%s265 + $0x90] sm:$0xff] %v1178
        %1243 = vst [vmem:[%s265 + $0x98] sm:$0xff] %v1179
        %1244 = vst [vmem:[%s265 + $0xa0] sm:$0xff] %v1180
        %1245 = vst [vmem:[%s265 + $0xa8] sm:$0xff] %v1181
        %1246 = vst [vmem:[%s265 + $0xb0] sm:$0xff] %v1182
        %1247 = vst [vmem:[%s265 + $0xb8] sm:$0xff] %v1183
        %1248 = vst [vmem:[%s265 + $0xc0] sm:$0xff] %v1184
        %1249 = vst [vmem:[%s265 + $0xc8] sm:$0xff] %v1185
        %1250 = vst [vmem:[%s265 + $0xd0] sm:$0xff] %v1186
        %1251 = vst [vmem:[%s265 + $0xd8] sm:$0xff] %v1187
        %1252 = vst [vmem:[%s265 + $0xe0] sm:$0xff] %v1188
        %1253 = vst [vmem:[%s265 + $0xe8] sm:$0xff] %v1189
        %1254 = vst [vmem:[%s265 + $0xf0] sm:$0xff] %v1190
        %1255 = vst [vmem:[%s265 + $0xf8] sm:$0xff] %v1191
        %1256 = vst [vmem:[%s265 + $0x100] sm:$0xff] %v1192
        %1257 = vst [vmem:[%s265 + $0x108] sm:$0xff] %v1193
        %1258 = vst [vmem:[%s265 + $0x110] sm:$0xff] %v1194
        %1259 = vst [vmem:[%s265 + $0x118] sm:$0xff] %v1195
        %1260 = vst [vmem:[%s265 + $0x120] sm:$0xff] %v1196
        %1261 = vst [vmem:[%s265 + $0x128] sm:$0xff] %v1197
        %1262 = vst [vmem:[%s265 + $0x130] sm:$0xff] %v1198
        %1263 = vst [vmem:[%s265 + $0x138] sm:$0xff] %v1199
        %1264 = vst [vmem:[%s265 + $0x140] sm:$0xff] %v1200
        %1265 = vst [vmem:[%s265 + $0x148] sm:$0xff] %v1201
        %1266 = vst [vmem:[%s265 + $0x150] sm:$0xff] %v1202
        %1267 = vst [vmem:[%s265 + $0x158] sm:$0xff] %v1203
        %1268 = vst [vmem:[%s265 + $0x160] sm:$0xff] %v1204
        %1269 = vst [vmem:[%s265 + $0x168] sm:$0xff] %v1205
        %1270 = vst [vmem:[%s265 + $0x170] sm:$0xff] %v1206
        %1271 = vst [vmem:[%s265 + $0x178] sm:$0xff] %v1207
        %1272 = vst [vmem:[%s265 + $0x180] sm:$0xff] %v1208
        %1273 = vst [vmem:[%s265 + $0x188] sm:$0xff] %v1209
        %1274 = vst [vmem:[%s265 + $0x190] sm:$0xff] %v1210
        %1275 = vst [vmem:[%s265 + $0x198] sm:$0xff] %v1211
        %1276 = vst [vmem:[%s265 + $0x1a0] sm:$0xff] %v1212
        %1277 = vst [vmem:[%s265 + $0x1a8] sm:$0xff] %v1213
        %1278 = vst [vmem:[%s265 + $0x1b0] sm:$0xff] %v1214
        %1279 = vst [vmem:[%s265 + $0x1b8] sm:$0xff] %v1215
        %1280 = vst [vmem:[%s265 + $0x1c0] sm:$0xff] %v1216
        %1281 = vst [vmem:[%s265 + $0x1c8] sm:$0xff] %v1217
        %1282 = vst [vmem:[%s265 + $0x1d0] sm:$0xff] %v1218
        %1283 = vst [vmem:[%s265 + $0x1d8] sm:$0xff] %v1219
        %1284 = vst [vmem:[%s265 + $0x1e0] sm:$0xff] %v1220
        %1285 = vst [vmem:[%s265 + $0x1e8] sm:$0xff] %v1221
        %1286 = vst [vmem:[%s265 + $0x1f0] sm:$0xff] %v1222
        %1287 = vst [vmem:[%s265 + $0x1f8] sm:$0xff] %v1223
      $region44: #{_conv3d_forward.1} parent=35 // pred_fallthru
        _
      %s1288 = smul.u32 64, %s20
      %p1289 = scmp.lt.s32.totalorder %s1288, 127
      %s1290 = scalar_select %p1289, %s1288, 127
      %p1291 = scmp.lt.s32.totalorder %s21, 0
      %s1292 = scalar_select %p1291, %s21, 0
      %s1293 = sadd.s32 %s1292, %s1290
      %s1294 = smul.addr %s1293, 8
      %s1295 = scalar_lea.vmem %s4, %s1294
      // Predicated region
      $region45: #{_conv3d_forward.1} parent=35 // pred_check
        %p1296 = pneg %p155
      $region46: #{_conv3d_forward.1} parent=35 // pred_check_branch
        %1298 = sbr.rel (%p1296) target = $region48
      $region47: #{_conv3d_forward.1} parent=35 // pred_region
        %s1299 = smul.u32 64, %s20
      $region48: #{_conv3d_forward.1} parent=35 // pred_fallthru
        _
    $region36: #{_conv3d_forward.1} parent=5 // pred_fallthru
      _
    %p1300 = scmp.le.s32.totalorder 2, %s10
    // Predicated region
    $region49: #{_conv3d_forward.1} parent=5 // pred_check
      %p1301 = pneg %p1300
    $region50: #{_conv3d_forward.1} parent=5 // pred_check_branch
      %1303 = sbr.rel (%p1301) target = $region52
    $region51: #{_conv3d_forward.1} parent=5 // pred_region
      %s1304 = ssub.s32 %s10, 2
      // Predicated region
      $region53: #{_conv3d_forward.1} parent=51 // pred_check
        %p1305 = pneg %p161
      $region54: #{_conv3d_forward.1} parent=51 // pred_check_branch
        %1307 = sbr.rel (%p1305) target = $region56
      $region55: #{_conv3d_forward.1} parent=51 // pred_region
        %s1308 = smul.u32 64, %s23
        %p1309 = scmp.lt.s32.totalorder %s1308, 127
        %s1310 = scalar_select %p1309, %s1308, 127
        %p1311 = scmp.lt.s32.totalorder %s24, 0
        %s1312 = scalar_select %p1311, %s24, 0
        %s1313 = sadd.s32 %s1312, %s1310
        %s1314 = smul.addr %s1313, 8
        %s1315 = scalar_lea.vmem %s4, %s1314
      $region56: #{_conv3d_forward.1} parent=51 // pred_fallthru
        _
    $region52: #{_conv3d_forward.1} parent=5 // pred_fallthru
      _
  $region6: #{_conv3d_forward.1} parent=0 // loop_footer
    %s14 = sadd.s32 1, %s10
  $region7: #{_conv3d_forward.1} parent=0 // loop_footer_branch
    %9 = sbr.rel target = $region3
  $region8: #{_conv3d_forward.1} parent=0 // loop_exit
    _

</llo_original>
